<compile_context>
chip_gen: v7x
topology: tpu7x:2x2x1
jax: 0.10.0
libtpu: 0.0.40
codegen_flags: <defaults>
</compile_context>

<pallas_src>
import numpy as np
import jax
import jax.numpy as jnp
from jax.experimental import pallas as pl
from jax.experimental.pallas import tpu as pltpu

SSIM_LOSS_WEIGHT = 0.85
L1_LOSS_WEIGHT = 0.9
EDGE_LOSS_WEIGHT = 0.9


# ----------------------------- host-side constant setup -----------------------------

def _reflect_idx(p, n):
    # PyTorch F.pad(mode="reflect") index mapping for pad=1 (no edge repeat).
    if p < 0:
        return -p
    if p >= n:
        return 2 * n - 2 - p
    return p


def _taps_matrix(n, taps):
    # M[i, reflect(i+o)] += taps[o+1]  for o in (-1, 0, 1)
    #   (M @ x)[i, :]  = sum_o taps[o] * x[reflect(i+o), :]      (row mix)
    #   (x @ M.T)[:,j] = sum_o taps[o] * x[:, reflect(j+o)]      (col mix, use transpose)
    m = np.zeros((n, n), np.float64)
    for i in range(n):
        for o, w in zip((-1, 0, 1), taps):
            m[i, _reflect_idx(i + o, n)] += w
    return m


def _gaussian_taps_3():
    # kornia get_gaussian_kernel1d(3, 1.5); 2D kernel is the rank-1 outer product.
    x = np.arange(3, dtype=np.float64) - 1.0
    g = np.exp(-(x * x) / (2.0 * 1.5 ** 2))
    return g / g.sum()


# ----------------------------- Pallas kernel (one sample per grid step) -----------------------------

def _depth_loss_kernel(pred_ref, tgt_ref, gr_ref, gct_ref, br_ref, bct_ref, out_ref):
    H, W = pred_ref.shape[1], pred_ref.shape[2]
    p = pred_ref[0]            # (H, W) f32
    t = tgt_ref[0]

    def fast_recip(x):
        # approx reciprocal (EUP slot) + one Newton step -> ~f32 accuracy
        r = pl.reciprocal(x, approx=True)
        return r * (2.0 - x * r)

    def sum2d(x):              # staged lane-first full reduction -> (1, 1)
        return jnp.sum(jnp.sum(x, axis=-1, keepdims=True), axis=0, keepdims=True)

    def norm_minmax(x):        # kornia normalize_min_max (per sample, eps=1e-6)
        xmin = jnp.min(jnp.min(x, axis=-1, keepdims=True), axis=0, keepdims=True)
        xmax = jnp.max(jnp.max(x, axis=-1, keepdims=True), axis=0, keepdims=True)
        return (x - xmin) * fast_recip(xmax - xmin + 1e-6)

    # --- normalized 3x3 laplacian (reflect pad) of target & pred ------------------
    # lap(x) = (box3x3(x) - 9*x) / 16 ; box3x3 is separable -> row mix then col mix.
    tp = jnp.concatenate([t, p], axis=1)                                     # (H, 2W)
    box_rows = jnp.dot(br_ref[...], tp, preferred_element_type=jnp.float32)  # batched row mix
    box_t = jnp.dot(box_rows[:, :W], bct_ref[...], preferred_element_type=jnp.float32)
    box_p = jnp.dot(box_rows[:, W:], bct_ref[...], preferred_element_type=jnp.float32)
    gt_edges = norm_minmax((box_t - 9.0 * t) * (1.0 / 16.0))
    pred_edges = norm_minmax((box_p - 9.0 * p) * (1.0 / 16.0))

    # --- 3x3 gaussian filtering of the 10 SSIM maps, lane-batched row mix ---------
    maps = [pred_edges, gt_edges, pred_edges * pred_edges, gt_edges * gt_edges,
            pred_edges * gt_edges,
            p, t, p * p, t * t, p * t]
    slab = jnp.concatenate(maps, axis=1)                                     # (H, 10W)
    rows = jnp.dot(gr_ref[...], slab, preferred_element_type=jnp.float32)    # one wide MXU push
    filt = [jnp.dot(rows[:, i * W:(i + 1) * W], gct_ref[...],
                    preferred_element_type=jnp.float32) for i in range(10)]

    def ssim_clamped_sum(mu1, mu2, e_aa, e_bb, e_ab, max_val):
        # kornia ssim_loss: sum over pixels of clamp((1 - SSIM)/2, 0, 1)
        c1 = (0.01 * max_val) ** 2
        c2 = (0.03 * max_val) ** 2
        mu1_sq = mu1 * mu1
        mu2_sq = mu2 * mu2
        mu12 = mu1 * mu2
        sigma1_sq = e_aa - mu1_sq
        sigma2_sq = e_bb - mu2_sq
        sigma12 = e_ab - mu12
        num = (2.0 * mu12 + c1) * (2.0 * sigma12 + c2)
        den = (mu1_sq + mu2_sq + c1) * (sigma1_sq + sigma2_sq + c2)
        ssim_map = num * fast_recip(den)
        return sum2d(jnp.clip((1.0 - ssim_map) * 0.5, 0.0, 1.0))

    edge_sum = ssim_clamped_sum(filt[0], filt[1], filt[2], filt[3], filt[4], 1.0)
    ssim_sum = ssim_clamped_sum(filt[5], filt[6], filt[7], filt[8], filt[9], 255.0)
    l1_sum = sum2d(jnp.abs(p - t))

    val = (SSIM_LOSS_WEIGHT * ssim_sum
           + L1_LOSS_WEIGHT * l1_sum
           + EDGE_LOSS_WEIGHT * edge_sum)                                    # (1, 1) weighted pixel-sum
    out_ref[...] = jnp.reshape(val, (1, 1, 1))


# ----------------------------- wrapper -----------------------------

def depth_loss(pred, target):
    pred = pred.astype(jnp.float32)
    target = target.astype(jnp.float32)
    B, H, W = pred.shape

    g = _gaussian_taps_3()
    gr = jnp.asarray(_taps_matrix(H, g).astype(np.float32))                    # gaussian row mix (H,H)
    gct = jnp.asarray(_taps_matrix(W, g).T.astype(np.float32))                 # gaussian col mix^T (W,W)
    br = jnp.asarray(_taps_matrix(H, (1.0, 1.0, 1.0)).astype(np.float32))      # box row mix (H,H)
    bct = jnp.asarray(_taps_matrix(W, (1.0, 1.0, 1.0)).T.astype(np.float32))   # box col mix^T (W,W)

    per_sample = pl.pallas_call(
        _depth_loss_kernel,
        out_shape=jax.ShapeDtypeStruct((B, 1, 1), jnp.float32),
        grid=(B,),
        in_specs=[
            pl.BlockSpec((1, H, W), lambda b: (b, 0, 0)),    # pred   (per-sample block)
            pl.BlockSpec((1, H, W), lambda b: (b, 0, 0)),    # target (per-sample block)
            pl.BlockSpec((H, H), lambda b: (0, 0)),          # constants stay VMEM-resident
            pl.BlockSpec((W, W), lambda b: (0, 0)),
            pl.BlockSpec((H, H), lambda b: (0, 0)),
            pl.BlockSpec((W, W), lambda b: (0, 0)),
        ],
        out_specs=pl.BlockSpec((1, 1, 1), lambda b: (b, 0, 0)),
        compiler_params=pltpu.CompilerParams(
            dimension_semantics=("parallel",),               # shard samples across TCs on v7x
            vmem_limit_bytes=32 * 1024 * 1024,               # safe on v5e/v6e/v7x at these block sizes
        ),
    )(pred, target, gr, gct, br, bct)

    # all three losses are means over B*1*H*W elements; weights already applied per sample
    return jnp.sum(per_sample) / float(B * H * W)


if __name__ == "__main__":
    key = jax.random.PRNGKey(0)
    k1, k2 = jax.random.split(key)
    B, H, W = 2, 16, 16
    pred = jax.random.uniform(k1, (B, H, W), jnp.float32, minval=0.0, maxval=255.0)
    target = jax.random.uniform(k2, (B, H, W), jnp.float32, minval=0.0, maxval=255.0)

    loss = depth_loss(pred, target)
    jax.block_until_ready(loss)
    assert bool(jnp.isfinite(loss)), "loss is not finite"
    print("KERNEL_OK")
</pallas_src>

<mosaic_0001>
module attributes {stable_mosaic.version = 11 : i64} {
  func.func @_depth_loss_kernel(%arg0: i32, %arg1: memref<1x16x16xf32, #tpu.memory_space<vmem>>, %arg2: memref<1x16x16xf32, #tpu.memory_space<vmem>>, %arg3: memref<16x16xf32, #tpu.memory_space<vmem>>, %arg4: memref<16x16xf32, #tpu.memory_space<vmem>>, %arg5: memref<16x16xf32, #tpu.memory_space<vmem>>, %arg6: memref<16x16xf32, #tpu.memory_space<vmem>>, %arg7: memref<1x1x1xf32, #tpu.memory_space<vmem>>) attributes {dimension_semantics = [#tpu.dimension_semantics<parallel>], iteration_bounds = array<i64: 2>, scalar_prefetch = 0 : i64, scratch_operands = 0 : i64, tpu.core_type = #tpu.core_type<tc>, window_params = [{transform_indices = @transform_0, window_bounds = array<i64: 1, 16, 16>}, {transform_indices = @transform_1, window_bounds = array<i64: 1, 16, 16>}, {pipeline_mode = #tpu.pipeline_mode<synchronous>, transform_indices = @transform_2, window_bounds = array<i64: 16, 16>}, {pipeline_mode = #tpu.pipeline_mode<synchronous>, transform_indices = @transform_3, window_bounds = array<i64: 16, 16>}, {pipeline_mode = #tpu.pipeline_mode<synchronous>, transform_indices = @transform_4, window_bounds = array<i64: 16, 16>}, {pipeline_mode = #tpu.pipeline_mode<synchronous>, transform_indices = @transform_5, window_bounds = array<i64: 16, 16>}, {transform_indices = @transform_6, window_bounds = array<i64: 1, 1, 1>}]} {
    %c0 = arith.constant 0 : index
    %c0_0 = arith.constant 0 : index
    %c0_1 = arith.constant 0 : index
    %0 = vector.load %arg1[%c0, %c0_0, %c0_1] : memref<1x16x16xf32, #tpu.memory_space<vmem>>, vector<1x16x16xf32>
    %1 = vector.shape_cast %0 : vector<1x16x16xf32> to vector<16x16xf32>
    %c0_2 = arith.constant 0 : index
    %c0_3 = arith.constant 0 : index
    %c0_4 = arith.constant 0 : index
    %2 = vector.load %arg2[%c0_2, %c0_3, %c0_4] : memref<1x16x16xf32, #tpu.memory_space<vmem>>, vector<1x16x16xf32>
    %3 = vector.shape_cast %2 : vector<1x16x16xf32> to vector<16x16xf32>
    %4 = tpu.concatenate %3, %1 in 1 : vector<16x16xf32>, vector<16x16xf32> -> vector<16x32xf32>
    %c0_5 = arith.constant 0 : index
    %c0_6 = arith.constant 0 : index
    %5 = vector.load %arg5[%c0_5, %c0_6] : memref<16x16xf32, #tpu.memory_space<vmem>>, vector<16x16xf32>
    %cst = arith.constant dense<0.000000e+00> : vector<16x32xf32>
    %6 = tpu.matmul %5, %4, %cst {dimension_numbers = #tpu.dot_dimension_numbers<[1], [0], [0], [1], [0, 0, 1, 1], [], []>} : vector<16x16xf32>, vector<16x32xf32>, vector<16x32xf32> -> vector<16x32xf32>
    %7 = vector.extract_strided_slice %6 {offsets = [0, 0], sizes = [16, 16], strides = [1, 1]} : vector<16x32xf32> to vector<16x16xf32>
    %c0_7 = arith.constant 0 : index
    %c0_8 = arith.constant 0 : index
    %8 = vector.load %arg6[%c0_7, %c0_8] : memref<16x16xf32, #tpu.memory_space<vmem>>, vector<16x16xf32>
    %cst_9 = arith.constant dense<0.000000e+00> : vector<16x16xf32>
    %9 = tpu.matmul %7, %8, %cst_9 {dimension_numbers = #tpu.dot_dimension_numbers<[1], [0], [0], [1], [0, 0, 1, 1], [], []>} : vector<16x16xf32>, vector<16x16xf32>, vector<16x16xf32> -> vector<16x16xf32>
    %10 = vector.extract_strided_slice %6 {offsets = [0, 16], sizes = [16, 16], strides = [1, 1]} : vector<16x32xf32> to vector<16x16xf32>
    %c0_10 = arith.constant 0 : index
    %c0_11 = arith.constant 0 : index
    %11 = vector.load %arg6[%c0_10, %c0_11] : memref<16x16xf32, #tpu.memory_space<vmem>>, vector<16x16xf32>
    %cst_12 = arith.constant dense<0.000000e+00> : vector<16x16xf32>
    %12 = tpu.matmul %10, %11, %cst_12 {dimension_numbers = #tpu.dot_dimension_numbers<[1], [0], [0], [1], [0, 0, 1, 1], [], []>} : vector<16x16xf32>, vector<16x16xf32>, vector<16x16xf32> -> vector<16x16xf32>
    %cst_13 = arith.constant 9.000000e+00 : f32
    %13 = vector.broadcast %cst_13 : f32 to vector<16x16xf32>
    %14 = arith.mulf %13, %3 : vector<16x16xf32>
    %15 = arith.subf %9, %14 : vector<16x16xf32>
    %cst_14 = arith.constant 6.250000e-02 : f32
    %16 = vector.broadcast %cst_14 : f32 to vector<16x16xf32>
    %17 = arith.mulf %15, %16 : vector<16x16xf32>
    %cst_15 = arith.constant dense<0x7F800000> : vector<16xf32>
    %18 = vector.multi_reduction <minimumf>, %17, %cst_15 [1] : vector<16x16xf32> to vector<16xf32>
    %19 = vector.shape_cast %18 : vector<16xf32> to vector<16x1xf32>
    %cst_16 = arith.constant dense<0x7F800000> : vector<1xf32>
    %20 = vector.multi_reduction <minimumf>, %19, %cst_16 [0] : vector<16x1xf32> to vector<1xf32>
    %21 = vector.shape_cast %20 : vector<1xf32> to vector<1x1xf32>
    %cst_17 = arith.constant dense<0xFF800000> : vector<16xf32>
    %22 = vector.multi_reduction <maximumf>, %17, %cst_17 [1] : vector<16x16xf32> to vector<16xf32>
    %23 = vector.shape_cast %22 : vector<16xf32> to vector<16x1xf32>
    %cst_18 = arith.constant dense<0xFF800000> : vector<1xf32>
    %24 = vector.multi_reduction <maximumf>, %23, %cst_18 [0] : vector<16x1xf32> to vector<1xf32>
    %25 = vector.shape_cast %24 : vector<1xf32> to vector<1x1xf32>
    %26 = vector.broadcast %21 : vector<1x1xf32> to vector<16x16xf32>
    %27 = arith.subf %17, %26 : vector<16x16xf32>
    %28 = arith.subf %25, %21 : vector<1x1xf32>
    %cst_19 = arith.constant 9.99999997E-7 : f32
    %29 = vector.broadcast %cst_19 : f32 to vector<1x1xf32>
    %30 = arith.addf %28, %29 : vector<1x1xf32>
    %31 = tpu.reciprocal %30 {approx = true} : vector<1x1xf32> -> vector<1x1xf32>
    %32 = arith.mulf %30, %31 : vector<1x1xf32>
    %cst_20 = arith.constant 2.000000e+00 : f32
    %33 = vector.broadcast %cst_20 : f32 to vector<1x1xf32>
    %34 = arith.subf %33, %32 : vector<1x1xf32>
    %35 = arith.mulf %31, %34 : vector<1x1xf32>
    %36 = vector.broadcast %35 : vector<1x1xf32> to vector<16x16xf32>
    %37 = arith.mulf %27, %36 : vector<16x16xf32>
    %cst_21 = arith.constant 9.000000e+00 : f32
    %38 = vector.broadcast %cst_21 : f32 to vector<16x16xf32>
    %39 = arith.mulf %38, %1 : vector<16x16xf32>
    %40 = arith.subf %12, %39 : vector<16x16xf32>
    %cst_22 = arith.constant 6.250000e-02 : f32
    %41 = vector.broadcast %cst_22 : f32 to vector<16x16xf32>
    %42 = arith.mulf %40, %41 : vector<16x16xf32>
    %cst_23 = arith.constant dense<0x7F800000> : vector<16xf32>
    %43 = vector.multi_reduction <minimumf>, %42, %cst_23 [1] : vector<16x16xf32> to vector<16xf32>
    %44 = vector.shape_cast %43 : vector<16xf32> to vector<16x1xf32>
    %cst_24 = arith.constant dense<0x7F800000> : vector<1xf32>
    %45 = vector.multi_reduction <minimumf>, %44, %cst_24 [0] : vector<16x1xf32> to vector<1xf32>
    %46 = vector.shape_cast %45 : vector<1xf32> to vector<1x1xf32>
    %cst_25 = arith.constant dense<0xFF800000> : vector<16xf32>
    %47 = vector.multi_reduction <maximumf>, %42, %cst_25 [1] : vector<16x16xf32> to vector<16xf32>
    %48 = vector.shape_cast %47 : vector<16xf32> to vector<16x1xf32>
    %cst_26 = arith.constant dense<0xFF800000> : vector<1xf32>
    %49 = vector.multi_reduction <maximumf>, %48, %cst_26 [0] : vector<16x1xf32> to vector<1xf32>
    %50 = vector.shape_cast %49 : vector<1xf32> to vector<1x1xf32>
    %51 = vector.broadcast %46 : vector<1x1xf32> to vector<16x16xf32>
    %52 = arith.subf %42, %51 : vector<16x16xf32>
    %53 = arith.subf %50, %46 : vector<1x1xf32>
    %cst_27 = arith.constant 9.99999997E-7 : f32
    %54 = vector.broadcast %cst_27 : f32 to vector<1x1xf32>
    %55 = arith.addf %53, %54 : vector<1x1xf32>
    %56 = tpu.reciprocal %55 {approx = true} : vector<1x1xf32> -> vector<1x1xf32>
    %57 = arith.mulf %55, %56 : vector<1x1xf32>
    %cst_28 = arith.constant 2.000000e+00 : f32
    %58 = vector.broadcast %cst_28 : f32 to vector<1x1xf32>
    %59 = arith.subf %58, %57 : vector<1x1xf32>
    %60 = arith.mulf %56, %59 : vector<1x1xf32>
    %61 = vector.broadcast %60 : vector<1x1xf32> to vector<16x16xf32>
    %62 = arith.mulf %52, %61 : vector<16x16xf32>
    %63 = arith.mulf %62, %62 : vector<16x16xf32>
    %64 = arith.mulf %37, %37 : vector<16x16xf32>
    %65 = arith.mulf %62, %37 : vector<16x16xf32>
    %66 = arith.mulf %1, %1 : vector<16x16xf32>
    %67 = arith.mulf %3, %3 : vector<16x16xf32>
    %68 = arith.mulf %1, %3 : vector<16x16xf32>
    %69 = tpu.concatenate %62, %37, %63, %64, %65, %1, %3, %66, %67, %68 in 1 : vector<16x16xf32>, vector<16x16xf32>, vector<16x16xf32>, vector<16x16xf32>, vector<16x16xf32>, vector<16x16xf32>, vector<16x16xf32>, vector<16x16xf32>, vector<16x16xf32>, vector<16x16xf32> -> vector<16x160xf32>
    %c0_29 = arith.constant 0 : index
    %c0_30 = arith.constant 0 : index
    %70 = vector.load %arg3[%c0_29, %c0_30] : memref<16x16xf32, #tpu.memory_space<vmem>>, vector<16x16xf32>
    %cst_31 = arith.constant dense<0.000000e+00> : vector<16x160xf32>
    %71 = tpu.matmul %70, %69, %cst_31 {dimension_numbers = #tpu.dot_dimension_numbers<[1], [0], [0], [1], [0, 0, 1, 1], [], []>} : vector<16x16xf32>, vector<16x160xf32>, vector<16x160xf32> -> vector<16x160xf32>
    %72 = vector.extract_strided_slice %71 {offsets = [0, 0], sizes = [16, 16], strides = [1, 1]} : vector<16x160xf32> to vector<16x16xf32>
    %c0_32 = arith.constant 0 : index
    %c0_33 = arith.constant 0 : index
    %73 = vector.load %arg4[%c0_32, %c0_33] : memref<16x16xf32, #tpu.memory_space<vmem>>, vector<16x16xf32>
    %cst_34 = arith.constant dense<0.000000e+00> : vector<16x16xf32>
    %74 = tpu.matmul %72, %73, %cst_34 {dimension_numbers = #tpu.dot_dimension_numbers<[1], [0], [0], [1], [0, 0, 1, 1], [], []>} : vector<16x16xf32>, vector<16x16xf32>, vector<16x16xf32> -> vector<16x16xf32>
    %75 = vector.extract_strided_slice %71 {offsets = [0, 16], sizes = [16, 16], strides = [1, 1]} : vector<16x160xf32> to vector<16x16xf32>
    %c0_35 = arith.constant 0 : index
    %c0_36 = arith.constant 0 : index
    %76 = vector.load %arg4[%c0_35, %c0_36] : memref<16x16xf32, #tpu.memory_space<vmem>>, vector<16x16xf32>
    %cst_37 = arith.constant dense<0.000000e+00> : vector<16x16xf32>
    %77 = tpu.matmul %75, %76, %cst_37 {dimension_numbers = #tpu.dot_dimension_numbers<[1], [0], [0], [1], [0, 0, 1, 1], [], []>} : vector<16x16xf32>, vector<16x16xf32>, vector<16x16xf32> -> vector<16x16xf32>
    %78 = vector.extract_strided_slice %71 {offsets = [0, 32], sizes = [16, 16], strides = [1, 1]} : vector<16x160xf32> to vector<16x16xf32>
    %c0_38 = arith.constant 0 : index
    %c0_39 = arith.constant 0 : index
    %79 = vector.load %arg4[%c0_38, %c0_39] : memref<16x16xf32, #tpu.memory_space<vmem>>, vector<16x16xf32>
    %cst_40 = arith.constant dense<0.000000e+00> : vector<16x16xf32>
    %80 = tpu.matmul %78, %79, %cst_40 {dimension_numbers = #tpu.dot_dimension_numbers<[1], [0], [0], [1], [0, 0, 1, 1], [], []>} : vector<16x16xf32>, vector<16x16xf32>, vector<16x16xf32> -> vector<16x16xf32>
    %81 = vector.extract_strided_slice %71 {offsets = [0, 48], sizes = [16, 16], strides = [1, 1]} : vector<16x160xf32> to vector<16x16xf32>
    %c0_41 = arith.constant 0 : index
    %c0_42 = arith.constant 0 : index
    %82 = vector.load %arg4[%c0_41, %c0_42] : memref<16x16xf32, #tpu.memory_space<vmem>>, vector<16x16xf32>
    %cst_43 = arith.constant dense<0.000000e+00> : vector<16x16xf32>
    %83 = tpu.matmul %81, %82, %cst_43 {dimension_numbers = #tpu.dot_dimension_numbers<[1], [0], [0], [1], [0, 0, 1, 1], [], []>} : vector<16x16xf32>, vector<16x16xf32>, vector<16x16xf32> -> vector<16x16xf32>
    %84 = vector.extract_strided_slice %71 {offsets = [0, 64], sizes = [16, 16], strides = [1, 1]} : vector<16x160xf32> to vector<16x16xf32>
    %c0_44 = arith.constant 0 : index
    %c0_45 = arith.constant 0 : index
    %85 = vector.load %arg4[%c0_44, %c0_45] : memref<16x16xf32, #tpu.memory_space<vmem>>, vector<16x16xf32>
    %cst_46 = arith.constant dense<0.000000e+00> : vector<16x16xf32>
    %86 = tpu.matmul %84, %85, %cst_46 {dimension_numbers = #tpu.dot_dimension_numbers<[1], [0], [0], [1], [0, 0, 1, 1], [], []>} : vector<16x16xf32>, vector<16x16xf32>, vector<16x16xf32> -> vector<16x16xf32>
    %87 = vector.extract_strided_slice %71 {offsets = [0, 80], sizes = [16, 16], strides = [1, 1]} : vector<16x160xf32> to vector<16x16xf32>
    %c0_47 = arith.constant 0 : index
    %c0_48 = arith.constant 0 : index
    %88 = vector.load %arg4[%c0_47, %c0_48] : memref<16x16xf32, #tpu.memory_space<vmem>>, vector<16x16xf32>
    %cst_49 = arith.constant dense<0.000000e+00> : vector<16x16xf32>
    %89 = tpu.matmul %87, %88, %cst_49 {dimension_numbers = #tpu.dot_dimension_numbers<[1], [0], [0], [1], [0, 0, 1, 1], [], []>} : vector<16x16xf32>, vector<16x16xf32>, vector<16x16xf32> -> vector<16x16xf32>
    %90 = vector.extract_strided_slice %71 {offsets = [0, 96], sizes = [16, 16], strides = [1, 1]} : vector<16x160xf32> to vector<16x16xf32>
    %c0_50 = arith.constant 0 : index
    %c0_51 = arith.constant 0 : index
    %91 = vector.load %arg4[%c0_50, %c0_51] : memref<16x16xf32, #tpu.memory_space<vmem>>, vector<16x16xf32>
    %cst_52 = arith.constant dense<0.000000e+00> : vector<16x16xf32>
    %92 = tpu.matmul %90, %91, %cst_52 {dimension_numbers = #tpu.dot_dimension_numbers<[1], [0], [0], [1], [0, 0, 1, 1], [], []>} : vector<16x16xf32>, vector<16x16xf32>, vector<16x16xf32> -> vector<16x16xf32>
    %93 = vector.extract_strided_slice %71 {offsets = [0, 112], sizes = [16, 16], strides = [1, 1]} : vector<16x160xf32> to vector<16x16xf32>
    %c0_53 = arith.constant 0 : index
    %c0_54 = arith.constant 0 : index
    %94 = vector.load %arg4[%c0_53, %c0_54] : memref<16x16xf32, #tpu.memory_space<vmem>>, vector<16x16xf32>
    %cst_55 = arith.constant dense<0.000000e+00> : vector<16x16xf32>
    %95 = tpu.matmul %93, %94, %cst_55 {dimension_numbers = #tpu.dot_dimension_numbers<[1], [0], [0], [1], [0, 0, 1, 1], [], []>} : vector<16x16xf32>, vector<16x16xf32>, vector<16x16xf32> -> vector<16x16xf32>
    %96 = vector.extract_strided_slice %71 {offsets = [0, 128], sizes = [16, 16], strides = [1, 1]} : vector<16x160xf32> to vector<16x16xf32>
    %c0_56 = arith.constant 0 : index
    %c0_57 = arith.constant 0 : index
    %97 = vector.load %arg4[%c0_56, %c0_57] : memref<16x16xf32, #tpu.memory_space<vmem>>, vector<16x16xf32>
    %cst_58 = arith.constant dense<0.000000e+00> : vector<16x16xf32>
    %98 = tpu.matmul %96, %97, %cst_58 {dimension_numbers = #tpu.dot_dimension_numbers<[1], [0], [0], [1], [0, 0, 1, 1], [], []>} : vector<16x16xf32>, vector<16x16xf32>, vector<16x16xf32> -> vector<16x16xf32>
    %99 = vector.extract_strided_slice %71 {offsets = [0, 144], sizes = [16, 16], strides = [1, 1]} : vector<16x160xf32> to vector<16x16xf32>
    %c0_59 = arith.constant 0 : index
    %c0_60 = arith.constant 0 : index
    %100 = vector.load %arg4[%c0_59, %c0_60] : memref<16x16xf32, #tpu.memory_space<vmem>>, vector<16x16xf32>
    %cst_61 = arith.constant dense<0.000000e+00> : vector<16x16xf32>
    %101 = tpu.matmul %99, %100, %cst_61 {dimension_numbers = #tpu.dot_dimension_numbers<[1], [0], [0], [1], [0, 0, 1, 1], [], []>} : vector<16x16xf32>, vector<16x16xf32>, vector<16x16xf32> -> vector<16x16xf32>
    %102 = arith.mulf %74, %74 : vector<16x16xf32>
    %103 = arith.mulf %77, %77 : vector<16x16xf32>
    %104 = arith.mulf %74, %77 : vector<16x16xf32>
    %105 = arith.subf %80, %102 : vector<16x16xf32>
    %106 = arith.subf %83, %103 : vector<16x16xf32>
    %107 = arith.subf %86, %104 : vector<16x16xf32>
    %cst_62 = arith.constant 2.000000e+00 : f32
    %108 = vector.broadcast %cst_62 : f32 to vector<16x16xf32>
    %109 = arith.mulf %108, %104 : vector<16x16xf32>
    %cst_63 = arith.constant 9.99999974E-5 : f32
    %110 = vector.broadcast %cst_63 : f32 to vector<16x16xf32>
    %111 = arith.addf %109, %110 : vector<16x16xf32>
    %cst_64 = arith.constant 2.000000e+00 : f32
    %112 = vector.broadcast %cst_64 : f32 to vector<16x16xf32>
    %113 = arith.mulf %112, %107 : vector<16x16xf32>
    %cst_65 = arith.constant 8.99999984E-4 : f32
    %114 = vector.broadcast %cst_65 : f32 to vector<16x16xf32>
    %115 = arith.addf %113, %114 : vector<16x16xf32>
    %116 = arith.mulf %111, %115 : vector<16x16xf32>
    %117 = arith.addf %102, %103 : vector<16x16xf32>
    %cst_66 = arith.constant 9.99999974E-5 : f32
    %118 = vector.broadcast %cst_66 : f32 to vector<16x16xf32>
    %119 = arith.addf %117, %118 : vector<16x16xf32>
    %120 = arith.addf %105, %106 : vector<16x16xf32>
    %cst_67 = arith.constant 8.99999984E-4 : f32
    %121 = vector.broadcast %cst_67 : f32 to vector<16x16xf32>
    %122 = arith.addf %120, %121 : vector<16x16xf32>
    %123 = arith.mulf %119, %122 : vector<16x16xf32>
    %124 = tpu.reciprocal %123 {approx = true} : vector<16x16xf32> -> vector<16x16xf32>
    %125 = arith.mulf %123, %124 : vector<16x16xf32>
    %cst_68 = arith.constant 2.000000e+00 : f32
    %126 = vector.broadcast %cst_68 : f32 to vector<16x16xf32>
    %127 = arith.subf %126, %125 : vector<16x16xf32>
    %128 = arith.mulf %124, %127 : vector<16x16xf32>
    %129 = arith.mulf %116, %128 : vector<16x16xf32>
    %cst_69 = arith.constant 1.000000e+00 : f32
    %130 = vector.broadcast %cst_69 : f32 to vector<16x16xf32>
    %131 = arith.subf %130, %129 : vector<16x16xf32>
    %cst_70 = arith.constant 5.000000e-01 : f32
    %132 = vector.broadcast %cst_70 : f32 to vector<16x16xf32>
    %133 = arith.mulf %131, %132 : vector<16x16xf32>
    %cst_71 = arith.constant 0.000000e+00 : f32
    %cst_72 = arith.constant 1.000000e+00 : f32
    %134 = vector.broadcast %cst_71 : f32 to vector<16x16xf32>
    %135 = arith.maximumf %134, %133 : vector<16x16xf32>
    %136 = vector.broadcast %cst_72 : f32 to vector<16x16xf32>
    %137 = arith.minimumf %136, %135 : vector<16x16xf32>
    %cst_73 = arith.constant dense<0.000000e+00> : vector<16xf32>
    %138 = vector.multi_reduction <add>, %137, %cst_73 [1] : vector<16x16xf32> to vector<16xf32>
    %139 = vector.shape_cast %138 : vector<16xf32> to vector<16x1xf32>
    %cst_74 = arith.constant dense<0.000000e+00> : vector<1xf32>
    %140 = vector.multi_reduction <add>, %139, %cst_74 [0] : vector<16x1xf32> to vector<1xf32>
    %141 = vector.shape_cast %140 : vector<1xf32> to vector<1x1xf32>
    %142 = arith.mulf %89, %89 : vector<16x16xf32>
    %143 = arith.mulf %92, %92 : vector<16x16xf32>
    %144 = arith.mulf %89, %92 : vector<16x16xf32>
    %145 = arith.subf %95, %142 : vector<16x16xf32>
    %146 = arith.subf %98, %143 : vector<16x16xf32>
    %147 = arith.subf %101, %144 : vector<16x16xf32>
    %cst_75 = arith.constant 2.000000e+00 : f32
    %148 = vector.broadcast %cst_75 : f32 to vector<16x16xf32>
    %149 = arith.mulf %148, %144 : vector<16x16xf32>
    %cst_76 = arith.constant 6.502500e+00 : f32
    %150 = vector.broadcast %cst_76 : f32 to vector<16x16xf32>
    %151 = arith.addf %149, %150 : vector<16x16xf32>
    %cst_77 = arith.constant 2.000000e+00 : f32
    %152 = vector.broadcast %cst_77 : f32 to vector<16x16xf32>
    %153 = arith.mulf %152, %147 : vector<16x16xf32>
    %cst_78 = arith.constant 5.852250e+01 : f32
    %154 = vector.broadcast %cst_78 : f32 to vector<16x16xf32>
    %155 = arith.addf %153, %154 : vector<16x16xf32>
    %156 = arith.mulf %151, %155 : vector<16x16xf32>
    %157 = arith.addf %142, %143 : vector<16x16xf32>
    %cst_79 = arith.constant 6.502500e+00 : f32
    %158 = vector.broadcast %cst_79 : f32 to vector<16x16xf32>
    %159 = arith.addf %157, %158 : vector<16x16xf32>
    %160 = arith.addf %145, %146 : vector<16x16xf32>
    %cst_80 = arith.constant 5.852250e+01 : f32
    %161 = vector.broadcast %cst_80 : f32 to vector<16x16xf32>
    %162 = arith.addf %160, %161 : vector<16x16xf32>
    %163 = arith.mulf %159, %162 : vector<16x16xf32>
    %164 = tpu.reciprocal %163 {approx = true} : vector<16x16xf32> -> vector<16x16xf32>
    %165 = arith.mulf %163, %164 : vector<16x16xf32>
    %cst_81 = arith.constant 2.000000e+00 : f32
    %166 = vector.broadcast %cst_81 : f32 to vector<16x16xf32>
    %167 = arith.subf %166, %165 : vector<16x16xf32>
    %168 = arith.mulf %164, %167 : vector<16x16xf32>
    %169 = arith.mulf %156, %168 : vector<16x16xf32>
    %cst_82 = arith.constant 1.000000e+00 : f32
    %170 = vector.broadcast %cst_82 : f32 to vector<16x16xf32>
    %171 = arith.subf %170, %169 : vector<16x16xf32>
    %cst_83 = arith.constant 5.000000e-01 : f32
    %172 = vector.broadcast %cst_83 : f32 to vector<16x16xf32>
    %173 = arith.mulf %171, %172 : vector<16x16xf32>
    %cst_84 = arith.constant 0.000000e+00 : f32
    %cst_85 = arith.constant 1.000000e+00 : f32
    %174 = vector.broadcast %cst_84 : f32 to vector<16x16xf32>
    %175 = arith.maximumf %174, %173 : vector<16x16xf32>
    %176 = vector.broadcast %cst_85 : f32 to vector<16x16xf32>
    %177 = arith.minimumf %176, %175 : vector<16x16xf32>
    %cst_86 = arith.constant dense<0.000000e+00> : vector<16xf32>
    %178 = vector.multi_reduction <add>, %177, %cst_86 [1] : vector<16x16xf32> to vector<16xf32>
    %179 = vector.shape_cast %178 : vector<16xf32> to vector<16x1xf32>
    %cst_87 = arith.constant dense<0.000000e+00> : vector<1xf32>
    %180 = vector.multi_reduction <add>, %179, %cst_87 [0] : vector<16x1xf32> to vector<1xf32>
    %181 = vector.shape_cast %180 : vector<1xf32> to vector<1x1xf32>
    %182 = arith.subf %1, %3 : vector<16x16xf32>
    %183 = math.absf %182 : vector<16x16xf32>
    %cst_88 = arith.constant dense<0.000000e+00> : vector<16xf32>
    %184 = vector.multi_reduction <add>, %183, %cst_88 [1] : vector<16x16xf32> to vector<16xf32>
    %185 = vector.shape_cast %184 : vector<16xf32> to vector<16x1xf32>
    %cst_89 = arith.constant dense<0.000000e+00> : vector<1xf32>
    %186 = vector.multi_reduction <add>, %185, %cst_89 [0] : vector<16x1xf32> to vector<1xf32>
    %187 = vector.shape_cast %186 : vector<1xf32> to vector<1x1xf32>
    %cst_90 = arith.constant 8.500000e-01 : f32
    %188 = vector.broadcast %cst_90 : f32 to vector<1x1xf32>
    %189 = arith.mulf %188, %181 : vector<1x1xf32>
    %cst_91 = arith.constant 0.899999976 : f32
    %190 = vector.broadcast %cst_91 : f32 to vector<1x1xf32>
    %191 = arith.mulf %190, %187 : vector<1x1xf32>
    %192 = arith.addf %189, %191 : vector<1x1xf32>
    %cst_92 = arith.constant 0.899999976 : f32
    %193 = vector.broadcast %cst_92 : f32 to vector<1x1xf32>
    %194 = arith.mulf %193, %141 : vector<1x1xf32>
    %195 = arith.addf %192, %194 : vector<1x1xf32>
    %196 = vector.shape_cast %195 : vector<1x1xf32> to vector<1x1x1xf32>
    %c0_93 = arith.constant 0 : index
    %c0_94 = arith.constant 0 : index
    %c0_95 = arith.constant 0 : index
    %197 = vector.load %arg7[%c0_93, %c0_94, %c0_95] : memref<1x1x1xf32, #tpu.memory_space<vmem>>, vector<1x1x1xf32>
    tpu.vector_store %arg7[%c0_93, %c0_94, %c0_95], %196 {strides = array<i32>} : memref<1x1x1xf32, #tpu.memory_space<vmem>>, vector<1x1x1xf32>,
    return
  }
  func.func @transform_0(%arg0: i32) -> (i32, i32, i32) {
    %c0_i32 = arith.constant 0 : i32
    %c0_i32_0 = arith.constant 0 : i32
    %c0_i32_1 = arith.constant 0 : i32
    return %arg0, %c0_i32, %c0_i32_0 : i32, i32, i32
  }
  func.func @transform_1(%arg0: i32) -> (i32, i32, i32) {
    %c0_i32 = arith.constant 0 : i32
    %c0_i32_0 = arith.constant 0 : i32
    %c0_i32_1 = arith.constant 0 : i32
    return %arg0, %c0_i32, %c0_i32_0 : i32, i32, i32
  }
  func.func @transform_2(%arg0: i32) -> (i32, i32) {
    %c0_i32 = arith.constant 0 : i32
    %c0_i32_0 = arith.constant 0 : i32
    %c0_i32_1 = arith.constant 0 : i32
    return %c0_i32, %c0_i32_0 : i32, i32
  }
  func.func @transform_3(%arg0: i32) -> (i32, i32) {
    %c0_i32 = arith.constant 0 : i32
    %c0_i32_0 = arith.constant 0 : i32
    %c0_i32_1 = arith.constant 0 : i32
    return %c0_i32, %c0_i32_0 : i32, i32
  }
  func.func @transform_4(%arg0: i32) -> (i32, i32) {
    %c0_i32 = arith.constant 0 : i32
    %c0_i32_0 = arith.constant 0 : i32
    %c0_i32_1 = arith.constant 0 : i32
    return %c0_i32, %c0_i32_0 : i32, i32
  }
  func.func @transform_5(%arg0: i32) -> (i32, i32) {
    %c0_i32 = arith.constant 0 : i32
    %c0_i32_0 = arith.constant 0 : i32
    %c0_i32_1 = arith.constant 0 : i32
    return %c0_i32, %c0_i32_0 : i32, i32
  }
  func.func @transform_6(%arg0: i32) -> (i32, i32, i32) {
    %c0_i32 = arith.constant 0 : i32
    %c0_i32_0 = arith.constant 0 : i32
    %c0_i32_1 = arith.constant 0 : i32
    return %arg0, %c0_i32, %c0_i32_0 : i32, i32, i32
  }
}

</mosaic_0001>

<llo_original>
// kernel: tpu_custom_call.1
$region0: #{tpu_custom_call.1}
  #allocation0 [shape = 'u32[]', space=smem, size = 0x4, offset = 0x4, fixed_abs, tag = 'smem constant byte address 0x4 - core index']
  #allocation1 [shape = 'u32[144,128]{1,0:T(1,128)}', space=vmem, size = 0x12000, scoped, tag = 'internal scratch']
  %s0 = inlined_call_operand.hbm [shape: f32[2,16,16], index: 0, kind: input, shape index: {}]
  %s1 = inlined_call_operand.hbm [shape: f32[2,16,16], index: 1, kind: input, shape index: {}]
  %s2 = inlined_call_operand.hbm [shape: f32[16,16], index: 2, kind: input, shape index: {}]
  %s3 = inlined_call_operand.hbm [shape: f32[16,16], index: 3, kind: input, shape index: {}]
  %s4 = inlined_call_operand.hbm [shape: f32[16,16], index: 4, kind: input, shape index: {}]
  %s5 = inlined_call_operand.vmem [shape: f32[16,16], index: 5, kind: input, shape index: {}]
  %s6 = inlined_call_operand.vmem [shape: f32[2,1,1], index: 6, kind: output, shape index: {}]
  %s7 = sld [smem:[#allocation0]]
  $region77: #{tpu_custom_call.1} parent=0
    _
  %s9 = ssub.s32 1, %s7
  %s10 = scalar_select 0, %s9, %s7
  $region1: #{tpu_custom_call.1} parent=0
    #allocation2 [shape = 'u8[16384]{0}', space=vmem, size = 0x4000, scoped, tag = 'input window, operand 0']
    #allocation3 [shape = 's32[2]{0}', space=sflag, size = 0x8, scoped, tag = 'scoped memory for tpu_custom_call.1']
    #allocation4 [shape = 'u8[16384]{0}', space=vmem, size = 0x4000, scoped, tag = 'input window, operand 1']
    #allocation5 [shape = 's32[2]{0}', space=sflag, size = 0x8, scoped, tag = 'scoped memory for tpu_custom_call.1']
    #allocation6 [shape = 'u8[8192]{0}', space=vmem, size = 0x2000, scoped, tag = 'input window, operand 2, single buffered']
    #allocation7 [shape = 'u8[8192]{0}', space=vmem, size = 0x2000, scoped, tag = 'input window, operand 3, single buffered']
    #allocation8 [shape = 's32[1]{0}', space=sflag, size = 0x4, scoped, tag = 'scoped memory for tpu_custom_call.1']
    #allocation9 [shape = 'u8[8192]{0}', space=vmem, size = 0x2000, scoped, tag = 'input window, operand 4, single buffered']
    %11 = vsyncpa [#allocation3], 0
    %s12 = scalar_lea.sflag [#allocation3], 1
    %13 = vsyncpa %s12, 0
    %14 = vsyncpa [#allocation5], 0
    %s15 = scalar_lea.sflag [#allocation5], 1
    %16 = vsyncpa %s15, 0
    %17 = vsyncpa [#allocation8], 0
    loop: start=0, step=1, limit=4
    $region2: #{tpu_custom_call.1} parent=1 // loop_pre_header
      _
    $region3: #{tpu_custom_call.1} parent=1 // loop_header
      %s19 = sphi 0, %s23
      %p20 = scmp.ge.s32.totalorder %s19, 4
      %s29 = sphi 0, %s31
      %s32 = sphi 0, %s29
      %s33 = sphi 0, %s32
      %s49 = sphi 0, %s33
      %s55 = sphi 0, %s57
      %s58 = sphi 0, %s55
      %s59 = sphi 0, %s58
      %s75 = sphi 0, %s59
      %s79 = sphi 0, %s79
      %s81 = sphi 0, %s79
      %s82 = sphi 0, %s81
      %s96 = sphi 0, %s82
      %s100 = sphi 0, %s100
      %s102 = sphi 0, %s100
      %s103 = sphi 0, %s102
      %s117 = sphi 0, %s103
      %s121 = sphi 0, %s121
      %s123 = sphi 0, %s121
      %s124 = sphi 0, %s123
      %s138 = sphi 0, %s124
      %s142 = sphi 0, %s142
      %s144 = sphi 0, %s142
      %s145 = sphi 0, %s144
      %s159 = sphi 0, %s145
      %s165 = sphi 0, %s167
      %s168 = sphi 0, %s165
      %s169 = sphi 0, %s168
      %s185 = sphi 0, %s169
    $region4: #{tpu_custom_call.1} parent=1 // loop_header_branch
      %22 = sbr.rel (%p20) target = $region8
    $region5: #{tpu_custom_call.1} parent=1 // loop_body
      %s24 = ssub.s32 %s19, 1
      %s25 = ssub.s32 %s19, 2
      %s26 = sadd.s32 %s19, 1
      %s27 = ssub.s32 %s19, %s26
      %p28 = scmp.eq.s32.totalorder %s27, 0
      %s30 = sadd.s32 %s29, 1
      %s31 = scalar_select %p28, %s29, %s30
      %p34 = pneg %p28
      %p35 = scmp.eq.s32.totalorder %s19, 1
      %p36 = por %p34, %p35
      %p37 = scmp.ne.s32.totalorder %s29, %s32
      %p38 = scmp.eq.s32.totalorder %s19, 0
      %p39 = por %p37, %p38
      %p40 = scmp.ne.s32.totalorder %s29, %s32
      %p41 = scmp.eq.s32.totalorder %s24, 1
      %p42 = por %p40, %p41
      %p43 = scmp.ne.s32.totalorder %s32, %s33
      %p44 = scmp.eq.s32.totalorder %s24, 0
      %p45 = por %p43, %p44
      %p46 = scmp.ne.s32.totalorder %s32, %s33
      %p47 = scmp.eq.s32.totalorder %s25, 1
      %p48 = por %p46, %p47
      %p50 = scmp.ne.s32.totalorder %s33, %s49
      %p51 = scmp.eq.s32.totalorder %s25, 0
      %p52 = por %p50, %p51
      %s53 = ssub.s32 %s19, %s26
      %p54 = scmp.eq.s32.totalorder %s53, 0
      %s56 = sadd.s32 %s55, 1
      %s57 = scalar_select %p54, %s55, %s56
      %p60 = pneg %p54
      %p61 = scmp.eq.s32.totalorder %s19, 1
      %p62 = por %p60, %p61
      %p63 = scmp.ne.s32.totalorder %s55, %s58
      %p64 = scmp.eq.s32.totalorder %s19, 0
      %p65 = por %p63, %p64
      %p66 = scmp.ne.s32.totalorder %s55, %s58
      %p67 = scmp.eq.s32.totalorder %s24, 1
      %p68 = por %p66, %p67
      %p69 = scmp.ne.s32.totalorder %s58, %s59
      %p70 = scmp.eq.s32.totalorder %s24, 0
      %p71 = por %p69, %p70
      %p72 = scmp.ne.s32.totalorder %s58, %s59
      %p73 = scmp.eq.s32.totalorder %s25, 1
      %p74 = por %p72, %p73
      %p76 = scmp.ne.s32.totalorder %s59, %s75
      %p77 = scmp.eq.s32.totalorder %s25, 0
      %p78 = por %p76, %p77
      %s80 = sadd.s32 %s79, 1
      %p83 = scmp.eq.s32.totalorder %s19, 1
      %p84 = scmp.ne.s32.totalorder %s79, %s81
      %p85 = scmp.eq.s32.totalorder %s19, 0
      %p86 = por %p84, %p85
      %p87 = scmp.ne.s32.totalorder %s79, %s81
      %p88 = scmp.eq.s32.totalorder %s24, 1
      %p89 = por %p87, %p88
      %p90 = scmp.ne.s32.totalorder %s81, %s82
      %p91 = scmp.eq.s32.totalorder %s24, 0
      %p92 = por %p90, %p91
      %p93 = scmp.ne.s32.totalorder %s81, %s82
      %p94 = scmp.eq.s32.totalorder %s25, 1
      %p95 = por %p93, %p94
      %p97 = scmp.ne.s32.totalorder %s82, %s96
      %p98 = scmp.eq.s32.totalorder %s25, 0
      %p99 = por %p97, %p98
      %s101 = sadd.s32 %s100, 1
      %p104 = scmp.eq.s32.totalorder %s19, 1
      %p105 = scmp.ne.s32.totalorder %s100, %s102
      %p106 = scmp.eq.s32.totalorder %s19, 0
      %p107 = por %p105, %p106
      %p108 = scmp.ne.s32.totalorder %s100, %s102
      %p109 = scmp.eq.s32.totalorder %s24, 1
      %p110 = por %p108, %p109
      %p111 = scmp.ne.s32.totalorder %s102, %s103
      %p112 = scmp.eq.s32.totalorder %s24, 0
      %p113 = por %p111, %p112
      %p114 = scmp.ne.s32.totalorder %s102, %s103
      %p115 = scmp.eq.s32.totalorder %s25, 1
      %p116 = por %p114, %p115
      %p118 = scmp.ne.s32.totalorder %s103, %s117
      %p119 = scmp.eq.s32.totalorder %s25, 0
      %p120 = por %p118, %p119
      %s122 = sadd.s32 %s121, 1
      %p125 = scmp.eq.s32.totalorder %s19, 1
      %p126 = scmp.ne.s32.totalorder %s121, %s123
      %p127 = scmp.eq.s32.totalorder %s19, 0
      %p128 = por %p126, %p127
      %p129 = scmp.ne.s32.totalorder %s121, %s123
      %p130 = scmp.eq.s32.totalorder %s24, 1
      %p131 = por %p129, %p130
      %p132 = scmp.ne.s32.totalorder %s123, %s124
      %p133 = scmp.eq.s32.totalorder %s24, 0
      %p134 = por %p132, %p133
      %p135 = scmp.ne.s32.totalorder %s123, %s124
      %p136 = scmp.eq.s32.totalorder %s25, 1
      %p137 = por %p135, %p136
      %p139 = scmp.ne.s32.totalorder %s124, %s138
      %p140 = scmp.eq.s32.totalorder %s25, 0
      %p141 = por %p139, %p140
      %s143 = sadd.s32 %s142, 1
      %p146 = scmp.eq.s32.totalorder %s19, 1
      %p147 = scmp.ne.s32.totalorder %s142, %s144
      %p148 = scmp.eq.s32.totalorder %s19, 0
      %p149 = por %p147, %p148
      %p150 = scmp.ne.s32.totalorder %s142, %s144
      %p151 = scmp.eq.s32.totalorder %s24, 1
      %p152 = por %p150, %p151
      %p153 = scmp.ne.s32.totalorder %s144, %s145
      %p154 = scmp.eq.s32.totalorder %s24, 0
      %p155 = por %p153, %p154
      %p156 = scmp.ne.s32.totalorder %s144, %s145
      %p157 = scmp.eq.s32.totalorder %s25, 1
      %p158 = por %p156, %p157
      %p160 = scmp.ne.s32.totalorder %s145, %s159
      %p161 = scmp.eq.s32.totalorder %s25, 0
      %p162 = por %p160, %p161
      %s163 = ssub.s32 %s19, %s26
      %p164 = scmp.eq.s32.totalorder %s163, 0
      %s166 = sadd.s32 %s165, 1
      %s167 = scalar_select %p164, %s165, %s166
      %p170 = pneg %p164
      %p171 = scmp.eq.s32.totalorder %s19, 1
      %p172 = por %p170, %p171
      %p173 = scmp.ne.s32.totalorder %s165, %s168
      %p174 = scmp.eq.s32.totalorder %s19, 0
      %p175 = por %p173, %p174
      %p176 = scmp.ne.s32.totalorder %s165, %s168
      %p177 = scmp.eq.s32.totalorder %s24, 1
      %p178 = por %p176, %p177
      %p179 = scmp.ne.s32.totalorder %s168, %s169
      %p180 = scmp.eq.s32.totalorder %s24, 0
      %p181 = por %p179, %p180
      %p182 = scmp.ne.s32.totalorder %s168, %s169
      %p183 = scmp.eq.s32.totalorder %s25, 1
      %p184 = por %p182, %p183
      %p186 = scmp.ne.s32.totalorder %s169, %s185
      %p187 = scmp.eq.s32.totalorder %s25, 0
      %p188 = por %p186, %p187
      %p189 = scmp.le.s32.totalorder 1, %s19
      %p190 = scmp.lt.s32.totalorder %s19, 3
      %p191 = pnand %p189, %p190
      %p192 = pneg %p191
      // Predicated region
      $region9: #{tpu_custom_call.1} parent=5 // pred_check
        _
      $region10: #{tpu_custom_call.1} parent=5 // pred_check_branch
        %194 = sbr.rel (%p191) target = $region12
      $region11: #{tpu_custom_call.1} parent=5 // pred_region
        %s195 = ssub.s32 %s19, 1
        // Predicated region
        $region13: #{tpu_custom_call.1} parent=11 // pred_check
          %p196 = pneg %p92
        $region14: #{tpu_custom_call.1} parent=11 // pred_check_branch
          %198 = sbr.rel (%p196) target = $region16
        $region15: #{tpu_custom_call.1} parent=11 // pred_region
          %s200 = ssub.s32 256, 256
          %201 = vsyncadd [#allocation5], %s200
          %s202 = sshll.u32 [#allocation6], 4
          %s203 = int_to_ptr.vmem [resolvable:$true] %s202
          %208 = dma.hbm_to_vmem [thread:$0]  %s2, 256, %s203, [#allocation5], 128, 128, 8
        $region16: #{tpu_custom_call.1} parent=11 // pred_fallthru
          _
        // Predicated region
        $region17: #{tpu_custom_call.1} parent=11 // pred_check
          %p209 = pneg %p113
        $region18: #{tpu_custom_call.1} parent=11 // pred_check_branch
          %211 = sbr.rel (%p209) target = $region20
        $region19: #{tpu_custom_call.1} parent=11 // pred_region
          %s213 = ssub.s32 256, 256
          %214 = vsyncadd [#allocation8], %s213
          %s215 = sshll.u32 [#allocation7], 4
          %s216 = int_to_ptr.vmem [resolvable:$true] %s215
          %221 = dma.hbm_to_vmem [thread:$0]  %s3, 256, %s216, [#allocation8], 128, 128, 8
        $region20: #{tpu_custom_call.1} parent=11 // pred_fallthru
          _
        // Predicated region
        $region21: #{tpu_custom_call.1} parent=11 // pred_check
          %p222 = pneg %p134
        $region22: #{tpu_custom_call.1} parent=11 // pred_check_branch
          %224 = sbr.rel (%p222) target = $region24
        $region23: #{tpu_custom_call.1} parent=11 // pred_region
          %s226 = ssub.s32 256, 256
          %227 = vsyncadd [#allocation8], %s226
          %s228 = sshll.u32 [#allocation9], 4
          %s229 = int_to_ptr.vmem [resolvable:$true] %s228
          %234 = dma.hbm_to_vmem [thread:$0]  %s4, 256, %s229, [#allocation8], 128, 128, 8
        $region24: #{tpu_custom_call.1} parent=11 // pred_fallthru
          _
        // Predicated region
        $region25: #{tpu_custom_call.1} parent=11 // pred_check
          %p235 = pneg %p155
        $region26: #{tpu_custom_call.1} parent=11 // pred_check_branch
          %237 = sbr.rel (%p235) target = $region28
        $region27: #{tpu_custom_call.1} parent=11 // pred_region
          _
        $region28: #{tpu_custom_call.1} parent=11 // pred_fallthru
          _
      $region12: #{tpu_custom_call.1} parent=5 // pred_fallthru
        _
      %p238 = scmp.lt.s32.totalorder %s19, 2
      // Predicated region
      $region29: #{tpu_custom_call.1} parent=5 // pred_check
        %p239 = pneg %p238
      $region30: #{tpu_custom_call.1} parent=5 // pred_check_branch
        %241 = sbr.rel (%p239) target = $region32
      $region31: #{tpu_custom_call.1} parent=5 // pred_region
        // Predicated region
        $region33: #{tpu_custom_call.1} parent=31 // pred_check
          %p242 = pneg %p39
        $region34: #{tpu_custom_call.1} parent=31 // pred_check_branch
          %244 = sbr.rel (%p242) target = $region36
        $region35: #{tpu_custom_call.1} parent=31 // pred_region
          %s245 = sand.u32 %s29, 1
          %s246 = scalar_lea.sflag [#allocation3], %s245
          %s247 = sand.u32 %s29, 1
          %s248 = smul.addr %s247, 16
          %s249 = scalar_lea.vmem [#allocation2], %s248
          %s251 = ssub.s32 256, 256
          %252 = vsyncadd %s246, %s251
          %s253 = smul.addr %s19, 2
          %s254 = smul.addr %s253, 128
          %s255 = scalar_lea.hbm %s0, %s254
          %s256 = sshll.u32 %s249, 4
          %s257 = int_to_ptr.vmem [resolvable:$true] %s256
          %262 = dma.hbm_to_vmem [thread:$0]  %s255, 256, %s257, %s246, 128, 128, 8
        $region36: #{tpu_custom_call.1} parent=31 // pred_fallthru
          _
        // Predicated region
        $region37: #{tpu_custom_call.1} parent=31 // pred_check
          %p263 = pneg %p65
        $region38: #{tpu_custom_call.1} parent=31 // pred_check_branch
          %265 = sbr.rel (%p263) target = $region40
        $region39: #{tpu_custom_call.1} parent=31 // pred_region
          %s266 = sand.u32 %s19, 1
          %s267 = scalar_lea.sflag [#allocation5], %s266
          %s268 = sand.u32 %s55, 1
          %s269 = smul.addr %s268, 16
          %s270 = scalar_lea.vmem [#allocation4], %s269
          %s272 = ssub.s32 256, 256
          %273 = vsyncadd %s267, %s272
          %s274 = smul.addr %s19, 2
          %s275 = smul.addr %s274, 128
          %s276 = scalar_lea.hbm %s1, %s275
          %s277 = sshll.u32 %s270, 4
          %s278 = int_to_ptr.vmem [resolvable:$true] %s277
          %283 = dma.hbm_to_vmem [thread:$0]  %s276, 256, %s278, %s267, 128, 128, 8
        $region40: #{tpu_custom_call.1} parent=31 // pred_fallthru
          _
      $region32: #{tpu_custom_call.1} parent=5 // pred_fallthru
        _
      %p284 = scmp.le.s32.totalorder 1, %s19
      %p285 = scmp.lt.s32.totalorder %s19, 3
      %p286 = pnand %p284, %p285
      %p287 = pneg %p286
      // Predicated region
      $region41: #{tpu_custom_call.1} parent=5 // pred_check
        _
      $region42: #{tpu_custom_call.1} parent=5 // pred_check_branch
        %289 = sbr.rel (%p286) target = $region44
      $region43: #{tpu_custom_call.1} parent=5 // pred_region
        %s290 = ssub.s32 %s19, 1
        %s291 = sand.u32 %s32, 1
        %s292 = scalar_lea.sflag [#allocation3], %s291
        %s293 = sand.u32 %s32, 1
        %s294 = smul.addr %s293, 16
        %s295 = scalar_lea.vmem [#allocation2], %s294
        // Predicated region
        $region45: #{tpu_custom_call.1} parent=43 // pred_check
          %p296 = pneg %p45
        $region46: #{tpu_custom_call.1} parent=43 // pred_check_branch
          %298 = sbr.rel (%p296) target = $region48
        $region47: #{tpu_custom_call.1} parent=43 // pred_region
          %299 = dma.done %s292, 256
        $region48: #{tpu_custom_call.1} parent=43 // pred_fallthru
          _
        %s300 = sand.u32 %s24, 1
        %s301 = scalar_lea.sflag [#allocation5], %s300
        %s302 = sand.u32 %s58, 1
        %s303 = smul.addr %s302, 16
        %s304 = scalar_lea.vmem [#allocation4], %s303
        // Predicated region
        $region49: #{tpu_custom_call.1} parent=43 // pred_check
          %p305 = pneg %p71
        $region50: #{tpu_custom_call.1} parent=43 // pred_check_branch
          %307 = sbr.rel (%p305) target = $region52
        $region51: #{tpu_custom_call.1} parent=43 // pred_region
          %308 = dma.done %s301, 256
        $region52: #{tpu_custom_call.1} parent=43 // pred_fallthru
          _
        // Predicated region
        $region53: #{tpu_custom_call.1} parent=43 // pred_check
          %p309 = pneg %p92
        $region54: #{tpu_custom_call.1} parent=43 // pred_check_branch
          %311 = sbr.rel (%p309) target = $region56
        $region55: #{tpu_custom_call.1} parent=43 // pred_region
          %312 = dma.done [#allocation5], 256
        $region56: #{tpu_custom_call.1} parent=43 // pred_fallthru
          _
        // Predicated region
        $region57: #{tpu_custom_call.1} parent=43 // pred_check
          %p313 = pneg %p113
        $region58: #{tpu_custom_call.1} parent=43 // pred_check_branch
          %315 = sbr.rel (%p313) target = $region60
        $region59: #{tpu_custom_call.1} parent=43 // pred_region
          %316 = dma.done [#allocation8], 256
        $region60: #{tpu_custom_call.1} parent=43 // pred_fallthru
          _
        // Predicated region
        $region61: #{tpu_custom_call.1} parent=43 // pred_check
          %p317 = pneg %p134
        $region62: #{tpu_custom_call.1} parent=43 // pred_check_branch
          %319 = sbr.rel (%p317) target = $region64
        $region63: #{tpu_custom_call.1} parent=43 // pred_region
          %320 = dma.done [#allocation8], 256
        $region64: #{tpu_custom_call.1} parent=43 // pred_fallthru
          _
        %s321 = sand.u32 %s32, 1
        %s322 = scalar_lea.sflag [#allocation3], %s321
        %s323 = sand.u32 %s32, 1
        %s324 = smul.addr %s323, 16
        %s325 = scalar_lea.vmem [#allocation2], %s324
        %p326 = pneg %p45
        %p327 = pneg %p42
        %s328 = sand.u32 %s24, 1
        %s329 = scalar_lea.sflag [#allocation5], %s328
        %s330 = sand.u32 %s58, 1
        %s331 = smul.addr %s330, 16
        %s332 = scalar_lea.vmem [#allocation4], %s331
        %p333 = pneg %p71
        %p334 = pneg %p68
        %p335 = pneg %p92
        %p336 = pneg %p89
        %p337 = pneg %p113
        %p338 = pneg %p110
        %p339 = pneg %p134
        %p340 = pneg %p131
        %p341 = pneg %p155
        %p342 = pneg %p152
        %p343 = pneg %p181
        %p344 = pneg %p178
        %p345 = scmp.lt.s32.totalorder %s24, 1
        %s346 = scalar_select %p345, %s24, 1
        %s347 = scalar_lea.vmem %s6, %s346
        %p348 = scmp.lt.s32.totalorder %s24, 1
        %s349 = scalar_select %p348, %s24, 1
        %s350 = scalar_lea.vmem %s6, %s349
        %v351 = vld [vmem:[%s295] sm:$0xff]
        %v352 = vld [vmem:[%s295 + $0x8] sm:$0xff]
        %v353 = vld [vmem:[%s304] sm:$0xff]
        %v354 = vld [vmem:[%s304 + $0x8] sm:$0xff]
        %357 = vrot.lane.b32.xlu0 %v351, 16
        %v358 = vpop.permute.xlu0 %357
        %359 = vrot.lane.b32.xlu0 %v352, 16
        %v360 = vpop.permute.xlu0 %359
        %vm363 = vcmask 130048
        %v364 = vsel %vm363, %v353, %v358
        %v365 = vsel %vm363, %v354, %v360
        %v366 = vld [vmem:[#allocation9] sm:$0xff]
        %v367 = vld [vmem:[#allocation9 + $0x8] sm:$0xff]
        %v369 = vsel %vm363, %v366, 0
        %v372 = vsel %vm363, %v367, 0
        %374 = vmatprep.subr.mxu0 0.0
        %375 = vmatpush1.msra.mxu0 %v364
        %376 = vmatprep.subr.mxu0 0.0
        %377 = vmatpush1.msra.mxu0 %v365
        %378 = vmatprep.subr.mxu0 0.0
        %379 = vmatpush1.msra.mxu0 0.0
        %380 = vmatprep.subr.mxu0 0.0
        %381 = vmatpush1.msra.mxu0 0.0
        %382 = vmatprep.subr.mxu0 0.0
        %383 = vmatpush1.msra.mxu0 0.0
        %384 = vmatprep.subr.mxu0 0.0
        %385 = vmatpush1.msra.mxu0 0.0
        %386 = vmatprep.subr.mxu0 0.0
        %387 = vmatpush1.msra.mxu0 0.0
        %388 = vmatprep.subr.mxu0 0.0
        %389 = vmatpush1.msra.mxu0 0.0
        %390 = vmatprep.subr.mxu0 0.0
        %391 = vmatpush1.msra.mxu0 0.0
        %392 = vmatprep.subr.mxu0 0.0
        %393 = vmatpush1.msra.mxu0 0.0
        %394 = vmatprep.subr.mxu0 0.0
        %395 = vmatpush1.msra.mxu0 0.0
        %396 = vmatprep.subr.mxu0 0.0
        %397 = vmatpush1.msra.mxu0 0.0
        %398 = vmatprep.subr.mxu0 0.0
        %399 = vmatpush1.msra.mxu0 0.0
        %400 = vmatprep.subr.mxu0 0.0
        %401 = vmatpush1.msra.mxu0 0.0
        %402 = vmatprep.subr.mxu0 0.0
        %403 = vmatpush1.msra.mxu0 0.0
        %404 = vmatprep.subr.mxu0 0.0
        %405 = vmatpush1.msra.mxu0 0.0
        %406 = vmatprep.subr.mxu0 0.0
        %407 = vmatpush1.msra.mxu0 0.0
        %408 = vmatprep.subr.mxu0 0.0
        %409 = vmatpush1.msra.mxu0 0.0
        %410 = vmatprep.subr.mxu0 0.0
        %411 = vmatpush1.msra.mxu0 0.0
        %412 = vmatprep.subr.mxu0 0.0
        %413 = vmatpush1.msra.mxu0 0.0
        %414 = vmatprep.subr.mxu0 0.0
        %415 = vmatpush1.msra.mxu0 0.0
        %416 = vmatprep.subr.mxu0 0.0
        %417 = vmatpush1.msra.mxu0 0.0
        %418 = vmatprep.subr.mxu0 0.0
        %419 = vmatpush1.msra.mxu0 0.0
        %420 = vmatprep.subr.mxu0 0.0
        %421 = vmatpush1.msra.mxu0 0.0
        %422 = vmatprep.subr.mxu0 0.0
        %423 = vmatpush1.msra.mxu0 0.0
        %424 = vmatprep.subr.mxu0 0.0
        %425 = vmatpush1.msra.mxu0 0.0
        %426 = vmatprep.subr.mxu0 0.0
        %427 = vmatpush1.msra.mxu0 0.0
        %428 = vmatprep.subr.mxu0 0.0
        %429 = vmatpush1.msra.mxu0 0.0
        %430 = vmatprep.subr.mxu0 0.0
        %431 = vmatpush1.msra.mxu0 0.0
        %432 = vmatprep.subr.mxu0 0.0
        %433 = vmatpush1.msra.mxu0 0.0
        %434 = vmatprep.subr.mxu0 0.0
        %435 = vmatpush1.msra.mxu0 0.0
        %436 = vmatprep.subr.mxu0 0.0
        %437 = vmatpush1.msra.mxu0 0.0
        %438 = vmatprep.mubr.f32.mxu0 0.0
        %439 = vmatmul.mubr.f32.gmra.mrb[0].mxu0 %v369
        %v440 = vpop.f32.mrb[0].mxu0
        %v441 = vadd.f32 0.0, %v440
        %v442 = vpop.f32.mrb[0].mxu0
        %443 = vmatprep.mubr.f32.mxu0 0.0
        %444 = vmatmul.mubr.f32.gmra.mrb[0].mxu0 %v372
        %v445 = vpop.f32.mrb[0].mxu0
        %v446 = vadd.f32 0.0, %v445
        %v447 = vpop.f32.mrb[0].mxu0
        %448 = vdwg.mxu0
        %v449 = vld [vmem:[%s5] sm:$0xff]
        %v450 = vld [vmem:[%s5 + $0x8] sm:$0xff]
        %v452 = vsel %vm363, %v441, 0
        %v455 = vsel %vm363, %v446, 0
        %457 = vmatprep.subr.mxu0 0.0
        %458 = vmatpush1.msra.mxu0 %v449
        %459 = vmatprep.subr.mxu0 0.0
        %460 = vmatpush1.msra.mxu0 %v450
        %461 = vmatprep.subr.mxu0 0.0
        %462 = vmatpush1.msra.mxu0 0.0
        %463 = vmatprep.subr.mxu0 0.0
        %464 = vmatpush1.msra.mxu0 0.0
        %465 = vmatprep.subr.mxu0 0.0
        %466 = vmatpush1.msra.mxu0 0.0
        %467 = vmatprep.subr.mxu0 0.0
        %468 = vmatpush1.msra.mxu0 0.0
        %469 = vmatprep.subr.mxu0 0.0
        %470 = vmatpush1.msra.mxu0 0.0
        %471 = vmatprep.subr.mxu0 0.0
        %472 = vmatpush1.msra.mxu0 0.0
        %473 = vmatprep.subr.mxu0 0.0
        %474 = vmatpush1.msra.mxu0 0.0
        %475 = vmatprep.subr.mxu0 0.0
        %476 = vmatpush1.msra.mxu0 0.0
        %477 = vmatprep.subr.mxu0 0.0
        %478 = vmatpush1.msra.mxu0 0.0
        %479 = vmatprep.subr.mxu0 0.0
        %480 = vmatpush1.msra.mxu0 0.0
        %481 = vmatprep.subr.mxu0 0.0
        %482 = vmatpush1.msra.mxu0 0.0
        %483 = vmatprep.subr.mxu0 0.0
        %484 = vmatpush1.msra.mxu0 0.0
        %485 = vmatprep.subr.mxu0 0.0
        %486 = vmatpush1.msra.mxu0 0.0
        %487 = vmatprep.subr.mxu0 0.0
        %488 = vmatpush1.msra.mxu0 0.0
        %489 = vmatprep.subr.mxu0 0.0
        %490 = vmatpush1.msra.mxu0 0.0
        %491 = vmatprep.subr.mxu0 0.0
        %492 = vmatpush1.msra.mxu0 0.0
        %493 = vmatprep.subr.mxu0 0.0
        %494 = vmatpush1.msra.mxu0 0.0
        %495 = vmatprep.subr.mxu0 0.0
        %496 = vmatpush1.msra.mxu0 0.0
        %497 = vmatprep.subr.mxu0 0.0
        %498 = vmatpush1.msra.mxu0 0.0
        %499 = vmatprep.subr.mxu0 0.0
        %500 = vmatpush1.msra.mxu0 0.0
        %501 = vmatprep.subr.mxu0 0.0
        %502 = vmatpush1.msra.mxu0 0.0
        %503 = vmatprep.subr.mxu0 0.0
        %504 = vmatpush1.msra.mxu0 0.0
        %505 = vmatprep.subr.mxu0 0.0
        %506 = vmatpush1.msra.mxu0 0.0
        %507 = vmatprep.subr.mxu0 0.0
        %508 = vmatpush1.msra.mxu0 0.0
        %509 = vmatprep.subr.mxu0 0.0
        %510 = vmatpush1.msra.mxu0 0.0
        %511 = vmatprep.subr.mxu0 0.0
        %512 = vmatpush1.msra.mxu0 0.0
        %513 = vmatprep.subr.mxu0 0.0
        %514 = vmatpush1.msra.mxu0 0.0
        %515 = vmatprep.subr.mxu0 0.0
        %516 = vmatpush1.msra.mxu0 0.0
        %517 = vmatprep.subr.mxu0 0.0
        %518 = vmatpush1.msra.mxu0 0.0
        %519 = vmatprep.subr.mxu0 0.0
        %520 = vmatpush1.msra.mxu0 0.0
        %521 = vmatprep.mubr.f32.mxu0 0.0
        %522 = vmatmul.mubr.f32.gmra.mrb[0].mxu0 %v452
        %v523 = vpop.f32.mrb[0].mxu0
        %v524 = vadd.f32 0.0, %v523
        %v525 = vpop.f32.mrb[0].mxu0
        %526 = vmatprep.mubr.f32.mxu0 0.0
        %527 = vmatmul.mubr.f32.gmra.mrb[0].mxu0 %v455
        %v528 = vpop.f32.mrb[0].mxu0
        %v529 = vadd.f32 0.0, %v528
        %v530 = vpop.f32.mrb[0].mxu0
        %531 = vdwg.mxu0
        %532 = vrot.lane.b32.xlu0 %v441, 112
        %v533 = vpop.permute.xlu0 %532
        %534 = vrot.lane.b32.xlu0 %v446, 112
        %v535 = vpop.permute.xlu0 %534
        %v536 = vsel %vm363, %v533, 0
        %v538 = vsel %vm363, %v535, 0
        %540 = vmatprep.subr.mxu0 0.0
        %541 = vmatpush1.msra.mxu0 %v449
        %542 = vmatprep.subr.mxu0 0.0
        %543 = vmatpush1.msra.mxu0 %v450
        %544 = vmatprep.subr.mxu0 0.0
        %545 = vmatpush1.msra.mxu0 0.0
        %546 = vmatprep.subr.mxu0 0.0
        %547 = vmatpush1.msra.mxu0 0.0
        %548 = vmatprep.subr.mxu0 0.0
        %549 = vmatpush1.msra.mxu0 0.0
        %550 = vmatprep.subr.mxu0 0.0
        %551 = vmatpush1.msra.mxu0 0.0
        %552 = vmatprep.subr.mxu0 0.0
        %553 = vmatpush1.msra.mxu0 0.0
        %554 = vmatprep.subr.mxu0 0.0
        %555 = vmatpush1.msra.mxu0 0.0
        %556 = vmatprep.subr.mxu0 0.0
        %557 = vmatpush1.msra.mxu0 0.0
        %558 = vmatprep.subr.mxu0 0.0
        %559 = vmatpush1.msra.mxu0 0.0
        %560 = vmatprep.subr.mxu0 0.0
        %561 = vmatpush1.msra.mxu0 0.0
        %562 = vmatprep.subr.mxu0 0.0
        %563 = vmatpush1.msra.mxu0 0.0
        %564 = vmatprep.subr.mxu0 0.0
        %565 = vmatpush1.msra.mxu0 0.0
        %566 = vmatprep.subr.mxu0 0.0
        %567 = vmatpush1.msra.mxu0 0.0
        %568 = vmatprep.subr.mxu0 0.0
        %569 = vmatpush1.msra.mxu0 0.0
        %570 = vmatprep.subr.mxu0 0.0
        %571 = vmatpush1.msra.mxu0 0.0
        %572 = vmatprep.subr.mxu0 0.0
        %573 = vmatpush1.msra.mxu0 0.0
        %574 = vmatprep.subr.mxu0 0.0
        %575 = vmatpush1.msra.mxu0 0.0
        %576 = vmatprep.subr.mxu0 0.0
        %577 = vmatpush1.msra.mxu0 0.0
        %578 = vmatprep.subr.mxu0 0.0
        %579 = vmatpush1.msra.mxu0 0.0
        %580 = vmatprep.subr.mxu0 0.0
        %581 = vmatpush1.msra.mxu0 0.0
        %582 = vmatprep.subr.mxu0 0.0
        %583 = vmatpush1.msra.mxu0 0.0
        %584 = vmatprep.subr.mxu0 0.0
        %585 = vmatpush1.msra.mxu0 0.0
        %586 = vmatprep.subr.mxu0 0.0
        %587 = vmatpush1.msra.mxu0 0.0
        %588 = vmatprep.subr.mxu0 0.0
        %589 = vmatpush1.msra.mxu0 0.0
        %590 = vmatprep.subr.mxu0 0.0
        %591 = vmatpush1.msra.mxu0 0.0
        %592 = vmatprep.subr.mxu0 0.0
        %593 = vmatpush1.msra.mxu0 0.0
        %594 = vmatprep.subr.mxu0 0.0
        %595 = vmatpush1.msra.mxu0 0.0
        %596 = vmatprep.subr.mxu0 0.0
        %597 = vmatpush1.msra.mxu0 0.0
        %598 = vmatprep.subr.mxu0 0.0
        %599 = vmatpush1.msra.mxu0 0.0
        %600 = vmatprep.subr.mxu0 0.0
        %601 = vmatpush1.msra.mxu0 0.0
        %602 = vmatprep.subr.mxu0 0.0
        %603 = vmatpush1.msra.mxu0 0.0
        %604 = vmatprep.mubr.f32.mxu0 0.0
        %605 = vmatmul.mubr.f32.gmra.mrb[0].mxu0 %v536
        %v606 = vpop.f32.mrb[0].mxu0
        %v607 = vadd.f32 0.0, %v606
        %v608 = vpop.f32.mrb[0].mxu0
        %609 = vmatprep.mubr.f32.mxu0 0.0
        %610 = vmatmul.mubr.f32.gmra.mrb[0].mxu0 %v538
        %v611 = vpop.f32.mrb[0].mxu0
        %v612 = vadd.f32 0.0, %v611
        %v613 = vpop.f32.mrb[0].mxu0
        %614 = vdwg.mxu0
        %v615 = vmul.f32 %v353, 9.0
        %v616 = vmul.f32 %v354, 9.0
        %v617 = vsub.f32 %v524, %v615
        %v618 = vsub.f32 %v529, %v616
        %v619 = vmul.f32 %v617, 0.0625
        %v620 = vmul.f32 %v618, 0.0625
        %v621 = vsel %vm363, %v619, inf
        %622 = vmin.xlane.f32.xlu0 %v621
        %v623 = vpop.xlane.xlu0 %622
        %v624 = vsel %vm363, %v620, inf
        %625 = vmin.xlane.f32.xlu0 %v624
        %v626 = vpop.xlane.xlu0 %625
        %v627 = vmin.f32 %v623, %v626
        %v628 = vrot.slane %v627, 4
        %v629 = vmin.f32 %v627, %v628
        %v630 = vrot.slane %v629, 2
        %v631 = vmin.f32 %v629, %v630
        %v632 = vrot.slane %v631, 1
        %v633 = vmin.f32 %v631, %v632
        %v634 = vsel %vm363, %v619, -inf
        %635 = vmax.xlane.f32.xlu0 %v634
        %v636 = vpop.xlane.xlu0 %635
        %v637 = vsel %vm363, %v620, -inf
        %638 = vmax.xlane.f32.xlu0 %v637
        %v639 = vpop.xlane.xlu0 %638
        %v640 = vmax.f32 %v636, %v639
        %v641 = vrot.slane %v640, 4
        %v642 = vmax.f32 %v640, %v641
        %v643 = vrot.slane %v642, 2
        %v644 = vmax.f32 %v642, %v643
        %v645 = vrot.slane %v644, 1
        %v646 = vmax.f32 %v644, %v645
        %v647 = vsub.f32 %v619, %v633
        %v648 = vsub.f32 %v620, %v633
        %v649 = vsub.f32 %v646, %v633
        %v650 = vadd.f32 %v649, 1e-06
        %v651 = vrcp.pop %v650
        %v652 = vmul.f32 %v650, %v651
        %v653 = vsub.f32 2.0, %v652
        %v654 = vmul.f32 %v651, %v653
        %v655 = vmul.f32 %v647, %v654
        %v656 = vmul.f32 %v648, %v654
        %v657 = vmul.f32 %v351, 9.0
        %v658 = vmul.f32 %v352, 9.0
        %v659 = vsub.f32 %v607, %v657
        %v660 = vsub.f32 %v612, %v658
        %v661 = vmul.f32 %v659, 0.0625
        %v662 = vmul.f32 %v660, 0.0625
        %v663 = vsel %vm363, %v661, inf
        %664 = vmin.xlane.f32.xlu0 %v663
        %v665 = vpop.xlane.xlu0 %664
        %v666 = vsel %vm363, %v662, inf
        %667 = vmin.xlane.f32.xlu0 %v666
        %v668 = vpop.xlane.xlu0 %667
        %v669 = vmin.f32 %v665, %v668
        %v670 = vrot.slane %v669, 4
        %v671 = vmin.f32 %v669, %v670
        %v672 = vrot.slane %v671, 2
        %v673 = vmin.f32 %v671, %v672
        %v674 = vrot.slane %v673, 1
        %v675 = vmin.f32 %v673, %v674
        %v676 = vsel %vm363, %v661, -inf
        %677 = vmax.xlane.f32.xlu0 %v676
        %v678 = vpop.xlane.xlu0 %677
        %v679 = vsel %vm363, %v662, -inf
        %680 = vmax.xlane.f32.xlu0 %v679
        %v681 = vpop.xlane.xlu0 %680
        %v682 = vmax.f32 %v678, %v681
        %v683 = vrot.slane %v682, 4
        %v684 = vmax.f32 %v682, %v683
        %v685 = vrot.slane %v684, 2
        %v686 = vmax.f32 %v684, %v685
        %v687 = vrot.slane %v686, 1
        %v688 = vmax.f32 %v686, %v687
        %v689 = vsub.f32 %v661, %v675
        %v690 = vsub.f32 %v662, %v675
        %v691 = vsub.f32 %v688, %v675
        %v692 = vadd.f32 %v691, 1e-06
        %v693 = vrcp.pop %v692
        %v694 = vmul.f32 %v692, %v693
        %v695 = vsub.f32 2.0, %v694
        %v696 = vmul.f32 %v693, %v695
        %v697 = vmul.f32 %v689, %v696
        %v698 = vmul.f32 %v690, %v696
        %v699 = vmul.f32 %v697, %v697
        %v700 = vmul.f32 %v698, %v698
        %v701 = vmul.f32 %v655, %v655
        %v702 = vmul.f32 %v656, %v656
        %v703 = vmul.f32 %v697, %v655
        %v704 = vmul.f32 %v698, %v656
        %v705 = vmul.f32 %v351, %v351
        %v706 = vmul.f32 %v352, %v352
        %v707 = vmul.f32 %v353, %v353
        %v708 = vmul.f32 %v354, %v354
        %v709 = vmul.f32 %v351, %v353
        %v710 = vmul.f32 %v352, %v354
        %713 = vrot.lane.b32.xlu0 %v655, 16
        %v714 = vpop.permute.xlu0 %713
        %715 = vrot.lane.b32.xlu0 %v656, 16
        %v716 = vpop.permute.xlu0 %715
        %721 = vrot.lane.b32.xlu0 %v699, 32
        %v722 = vpop.permute.xlu0 %721
        %723 = vrot.lane.b32.xlu0 %v700, 32
        %v724 = vpop.permute.xlu0 %723
        %729 = vrot.lane.b32.xlu0 %v701, 48
        %v730 = vpop.permute.xlu0 %729
        %731 = vrot.lane.b32.xlu0 %v702, 48
        %v732 = vpop.permute.xlu0 %731
        %737 = vrot.lane.b32.xlu0 %v703, 64
        %v738 = vpop.permute.xlu0 %737
        %739 = vrot.lane.b32.xlu0 %v704, 64
        %v740 = vpop.permute.xlu0 %739
        %743 = vrot.lane.b32.xlu0 %v351, 80
        %v744 = vpop.permute.xlu0 %743
        %745 = vrot.lane.b32.xlu0 %v352, 80
        %v746 = vpop.permute.xlu0 %745
        %751 = vrot.lane.b32.xlu0 %v353, 96
        %v752 = vpop.permute.xlu0 %751
        %753 = vrot.lane.b32.xlu0 %v354, 96
        %v754 = vpop.permute.xlu0 %753
        %759 = vrot.lane.b32.xlu0 %v705, 112
        %v760 = vpop.permute.xlu0 %759
        %761 = vrot.lane.b32.xlu0 %v706, 112
        %v762 = vpop.permute.xlu0 %761
        %767 = vrot.lane.b32.xlu0 %v709, 16
        %v768 = vpop.permute.xlu0 %767
        %769 = vrot.lane.b32.xlu0 %v710, 16
        %v770 = vpop.permute.xlu0 %769
        %v773 = vsel %vm363, %v697, %v714
        %v774 = vsel %vm363, %v698, %v716
        %vm775 = vcmask 261120
        %v776 = vsel %vm775, %v773, %v722
        %v777 = vsel %vm775, %v774, %v724
        %vm778 = vcmask 392192
        %v779 = vsel %vm778, %v776, %v730
        %v780 = vsel %vm778, %v777, %v732
        %vm781 = vcmask 523264
        %v782 = vsel %vm781, %v779, %v738
        %v783 = vsel %vm781, %v780, %v740
        %vm784 = vcmask 654336
        %v785 = vsel %vm784, %v782, %v744
        %v786 = vsel %vm784, %v783, %v746
        %vm787 = vcmask 785408
        %v788 = vsel %vm787, %v785, %v752
        %v789 = vsel %vm787, %v786, %v754
        %vm790 = vcmask 916480
        %v791 = vsel %vm790, %v788, %v760
        %v792 = vsel %vm790, %v789, %v762
        %v793 = vsel %vm363, %v707, %v768
        %v794 = vsel %vm363, %v708, %v770
        %v795 = vld [vmem:[#allocation6] sm:$0xff]
        %v796 = vld [vmem:[#allocation6 + $0x8] sm:$0xff]
        %v798 = vsel %vm363, %v795, 0
        %v801 = vsel %vm363, %v796, 0
        %803 = vmatprep.subr.mxu0 %v793
        %804 = vmatpush1.msra.mxu0 %v791
        %805 = vmatprep.subr.mxu0 %v794
        %806 = vmatpush1.msra.mxu0 %v792
        %807 = vmatprep.subr.mxu0 0.0
        %808 = vmatpush1.msra.mxu0 0.0
        %809 = vmatprep.subr.mxu0 0.0
        %810 = vmatpush1.msra.mxu0 0.0
        %811 = vmatprep.subr.mxu0 0.0
        %812 = vmatpush1.msra.mxu0 0.0
        %813 = vmatprep.subr.mxu0 0.0
        %814 = vmatpush1.msra.mxu0 0.0
        %815 = vmatprep.subr.mxu0 0.0
        %816 = vmatpush1.msra.mxu0 0.0
        %817 = vmatprep.subr.mxu0 0.0
        %818 = vmatpush1.msra.mxu0 0.0
        %819 = vmatprep.subr.mxu0 0.0
        %820 = vmatpush1.msra.mxu0 0.0
        %821 = vmatprep.subr.mxu0 0.0
        %822 = vmatpush1.msra.mxu0 0.0
        %823 = vmatprep.subr.mxu0 0.0
        %824 = vmatpush1.msra.mxu0 0.0
        %825 = vmatprep.subr.mxu0 0.0
        %826 = vmatpush1.msra.mxu0 0.0
        %827 = vmatprep.subr.mxu0 0.0
        %828 = vmatpush1.msra.mxu0 0.0
        %829 = vmatprep.subr.mxu0 0.0
        %830 = vmatpush1.msra.mxu0 0.0
        %831 = vmatprep.subr.mxu0 0.0
        %832 = vmatpush1.msra.mxu0 0.0
        %833 = vmatprep.subr.mxu0 0.0
        %834 = vmatpush1.msra.mxu0 0.0
        %835 = vmatprep.subr.mxu0 0.0
        %836 = vmatpush1.msra.mxu0 0.0
        %837 = vmatprep.subr.mxu0 0.0
        %838 = vmatpush1.msra.mxu0 0.0
        %839 = vmatprep.subr.mxu0 0.0
        %840 = vmatpush1.msra.mxu0 0.0
        %841 = vmatprep.subr.mxu0 0.0
        %842 = vmatpush1.msra.mxu0 0.0
        %843 = vmatprep.subr.mxu0 0.0
        %844 = vmatpush1.msra.mxu0 0.0
        %845 = vmatprep.subr.mxu0 0.0
        %846 = vmatpush1.msra.mxu0 0.0
        %847 = vmatprep.subr.mxu0 0.0
        %848 = vmatpush1.msra.mxu0 0.0
        %849 = vmatprep.subr.mxu0 0.0
        %850 = vmatpush1.msra.mxu0 0.0
        %851 = vmatprep.subr.mxu0 0.0
        %852 = vmatpush1.msra.mxu0 0.0
        %853 = vmatprep.subr.mxu0 0.0
        %854 = vmatpush1.msra.mxu0 0.0
        %855 = vmatprep.subr.mxu0 0.0
        %856 = vmatpush1.msra.mxu0 0.0
        %857 = vmatprep.subr.mxu0 0.0
        %858 = vmatpush1.msra.mxu0 0.0
        %859 = vmatprep.subr.mxu0 0.0
        %860 = vmatpush1.msra.mxu0 0.0
        %861 = vmatprep.subr.mxu0 0.0
        %862 = vmatpush1.msra.mxu0 0.0
        %863 = vmatprep.subr.mxu0 0.0
        %864 = vmatpush1.msra.mxu0 0.0
        %865 = vmatprep.subr.mxu0 0.0
        %866 = vmatpush1.msra.mxu0 0.0
        %867 = vmatprep.mubr.f32.mxu0 0.0
        %868 = vmatmul.mubr.f32.gmra.mrb[0].mxu0 %v798
        %v869 = vpop.f32.mrb[0].mxu0
        %v870 = vadd.f32 0.0, %v869
        %v871 = vpop.f32.mrb[0].mxu0
        %v872 = vadd.f32 0.0, %v871
        %873 = vmatprep.mubr.f32.mxu0 0.0
        %874 = vmatmul.mubr.f32.gmra.mrb[0].mxu0 %v801
        %v875 = vpop.f32.mrb[0].mxu0
        %v876 = vadd.f32 0.0, %v875
        %v877 = vpop.f32.mrb[0].mxu0
        %v878 = vadd.f32 0.0, %v877
        %879 = vdwg.mxu0
        %v880 = vld [vmem:[#allocation7] sm:$0xff]
        %v881 = vld [vmem:[#allocation7 + $0x8] sm:$0xff]
        %v883 = vsel %vm363, %v870, 0
        %v886 = vsel %vm363, %v876, 0
        %888 = vmatprep.subr.mxu0 0.0
        %889 = vmatpush1.msra.mxu0 %v880
        %890 = vmatprep.subr.mxu0 0.0
        %891 = vmatpush1.msra.mxu0 %v881
        %892 = vmatprep.subr.mxu0 0.0
        %893 = vmatpush1.msra.mxu0 0.0
        %894 = vmatprep.subr.mxu0 0.0
        %895 = vmatpush1.msra.mxu0 0.0
        %896 = vmatprep.subr.mxu0 0.0
        %897 = vmatpush1.msra.mxu0 0.0
        %898 = vmatprep.subr.mxu0 0.0
        %899 = vmatpush1.msra.mxu0 0.0
        %900 = vmatprep.subr.mxu0 0.0
        %901 = vmatpush1.msra.mxu0 0.0
        %902 = vmatprep.subr.mxu0 0.0
        %903 = vmatpush1.msra.mxu0 0.0
        %904 = vmatprep.subr.mxu0 0.0
        %905 = vmatpush1.msra.mxu0 0.0
        %906 = vmatprep.subr.mxu0 0.0
        %907 = vmatpush1.msra.mxu0 0.0
        %908 = vmatprep.subr.mxu0 0.0
        %909 = vmatpush1.msra.mxu0 0.0
        %910 = vmatprep.subr.mxu0 0.0
        %911 = vmatpush1.msra.mxu0 0.0
        %912 = vmatprep.subr.mxu0 0.0
        %913 = vmatpush1.msra.mxu0 0.0
        %914 = vmatprep.subr.mxu0 0.0
        %915 = vmatpush1.msra.mxu0 0.0
        %916 = vmatprep.subr.mxu0 0.0
        %917 = vmatpush1.msra.mxu0 0.0
        %918 = vmatprep.subr.mxu0 0.0
        %919 = vmatpush1.msra.mxu0 0.0
        %920 = vmatprep.subr.mxu0 0.0
        %921 = vmatpush1.msra.mxu0 0.0
        %922 = vmatprep.subr.mxu0 0.0
        %923 = vmatpush1.msra.mxu0 0.0
        %924 = vmatprep.subr.mxu0 0.0
        %925 = vmatpush1.msra.mxu0 0.0
        %926 = vmatprep.subr.mxu0 0.0
        %927 = vmatpush1.msra.mxu0 0.0
        %928 = vmatprep.subr.mxu0 0.0
        %929 = vmatpush1.msra.mxu0 0.0
        %930 = vmatprep.subr.mxu0 0.0
        %931 = vmatpush1.msra.mxu0 0.0
        %932 = vmatprep.subr.mxu0 0.0
        %933 = vmatpush1.msra.mxu0 0.0
        %934 = vmatprep.subr.mxu0 0.0
        %935 = vmatpush1.msra.mxu0 0.0
        %936 = vmatprep.subr.mxu0 0.0
        %937 = vmatpush1.msra.mxu0 0.0
        %938 = vmatprep.subr.mxu0 0.0
        %939 = vmatpush1.msra.mxu0 0.0
        %940 = vmatprep.subr.mxu0 0.0
        %941 = vmatpush1.msra.mxu0 0.0
        %942 = vmatprep.subr.mxu0 0.0
        %943 = vmatpush1.msra.mxu0 0.0
        %944 = vmatprep.subr.mxu0 0.0
        %945 = vmatpush1.msra.mxu0 0.0
        %946 = vmatprep.subr.mxu0 0.0
        %947 = vmatpush1.msra.mxu0 0.0
        %948 = vmatprep.subr.mxu0 0.0
        %949 = vmatpush1.msra.mxu0 0.0
        %950 = vmatprep.subr.mxu0 0.0
        %951 = vmatpush1.msra.mxu0 0.0
        %952 = vmatprep.mubr.f32.mxu0 0.0
        %953 = vmatmul.mubr.f32.gmra.mrb[0].mxu0 %v883
        %v954 = vpop.f32.mrb[0].mxu0
        %v955 = vadd.f32 0.0, %v954
        %v956 = vpop.f32.mrb[0].mxu0
        %957 = vmatprep.mubr.f32.mxu0 0.0
        %958 = vmatmul.mubr.f32.gmra.mrb[0].mxu0 %v886
        %v959 = vpop.f32.mrb[0].mxu0
        %v960 = vadd.f32 0.0, %v959
        %v961 = vpop.f32.mrb[0].mxu0
        %962 = vdwg.mxu0
        %963 = vrot.lane.b32.xlu0 %v870, 112
        %v964 = vpop.permute.xlu0 %963
        %965 = vrot.lane.b32.xlu0 %v876, 112
        %v966 = vpop.permute.xlu0 %965
        %v967 = vsel %vm363, %v964, 0
        %v969 = vsel %vm363, %v966, 0
        %971 = vmatprep.subr.mxu0 0.0
        %972 = vmatpush1.msra.mxu0 %v880
        %973 = vmatprep.subr.mxu0 0.0
        %974 = vmatpush1.msra.mxu0 %v881
        %975 = vmatprep.subr.mxu0 0.0
        %976 = vmatpush1.msra.mxu0 0.0
        %977 = vmatprep.subr.mxu0 0.0
        %978 = vmatpush1.msra.mxu0 0.0
        %979 = vmatprep.subr.mxu0 0.0
        %980 = vmatpush1.msra.mxu0 0.0
        %981 = vmatprep.subr.mxu0 0.0
        %982 = vmatpush1.msra.mxu0 0.0
        %983 = vmatprep.subr.mxu0 0.0
        %984 = vmatpush1.msra.mxu0 0.0
        %985 = vmatprep.subr.mxu0 0.0
        %986 = vmatpush1.msra.mxu0 0.0
        %987 = vmatprep.subr.mxu0 0.0
        %988 = vmatpush1.msra.mxu0 0.0
        %989 = vmatprep.subr.mxu0 0.0
        %990 = vmatpush1.msra.mxu0 0.0
        %991 = vmatprep.subr.mxu0 0.0
        %992 = vmatpush1.msra.mxu0 0.0
        %993 = vmatprep.subr.mxu0 0.0
        %994 = vmatpush1.msra.mxu0 0.0
        %995 = vmatprep.subr.mxu0 0.0
        %996 = vmatpush1.msra.mxu0 0.0
        %997 = vmatprep.subr.mxu0 0.0
        %998 = vmatpush1.msra.mxu0 0.0
        %999 = vmatprep.subr.mxu0 0.0
        %1000 = vmatpush1.msra.mxu0 0.0
        %1001 = vmatprep.subr.mxu0 0.0
        %1002 = vmatpush1.msra.mxu0 0.0
        %1003 = vmatprep.subr.mxu0 0.0
        %1004 = vmatpush1.msra.mxu0 0.0
        %1005 = vmatprep.subr.mxu0 0.0
        %1006 = vmatpush1.msra.mxu0 0.0
        %1007 = vmatprep.subr.mxu0 0.0
        %1008 = vmatpush1.msra.mxu0 0.0
        %1009 = vmatprep.subr.mxu0 0.0
        %1010 = vmatpush1.msra.mxu0 0.0
        %1011 = vmatprep.subr.mxu0 0.0
        %1012 = vmatpush1.msra.mxu0 0.0
        %1013 = vmatprep.subr.mxu0 0.0
        %1014 = vmatpush1.msra.mxu0 0.0
        %1015 = vmatprep.subr.mxu0 0.0
        %1016 = vmatpush1.msra.mxu0 0.0
        %1017 = vmatprep.subr.mxu0 0.0
        %1018 = vmatpush1.msra.mxu0 0.0
        %1019 = vmatprep.subr.mxu0 0.0
        %1020 = vmatpush1.msra.mxu0 0.0
        %1021 = vmatprep.subr.mxu0 0.0
        %1022 = vmatpush1.msra.mxu0 0.0
        %1023 = vmatprep.subr.mxu0 0.0
        %1024 = vmatpush1.msra.mxu0 0.0
        %1025 = vmatprep.subr.mxu0 0.0
        %1026 = vmatpush1.msra.mxu0 0.0
        %1027 = vmatprep.subr.mxu0 0.0
        %1028 = vmatpush1.msra.mxu0 0.0
        %1029 = vmatprep.subr.mxu0 0.0
        %1030 = vmatpush1.msra.mxu0 0.0
        %1031 = vmatprep.subr.mxu0 0.0
        %1032 = vmatpush1.msra.mxu0 0.0
        %1033 = vmatprep.subr.mxu0 0.0
        %1034 = vmatpush1.msra.mxu0 0.0
        %1035 = vmatprep.mubr.f32.mxu0 0.0
        %1036 = vmatmul.mubr.f32.gmra.mrb[0].mxu0 %v967
        %v1037 = vpop.f32.mrb[0].mxu0
        %v1038 = vadd.f32 0.0, %v1037
        %v1039 = vpop.f32.mrb[0].mxu0
        %1040 = vmatprep.mubr.f32.mxu0 0.0
        %1041 = vmatmul.mubr.f32.gmra.mrb[0].mxu0 %v969
        %v1042 = vpop.f32.mrb[0].mxu0
        %v1043 = vadd.f32 0.0, %v1042
        %v1044 = vpop.f32.mrb[0].mxu0
        %1045 = vdwg.mxu0
        %1046 = vrot.lane.b32.xlu0 %v870, 96
        %v1047 = vpop.permute.xlu0 %1046
        %1048 = vrot.lane.b32.xlu0 %v876, 96
        %v1049 = vpop.permute.xlu0 %1048
        %v1050 = vsel %vm363, %v1047, 0
        %v1052 = vsel %vm363, %v1049, 0
        %1054 = vmatprep.subr.mxu0 0.0
        %1055 = vmatpush1.msra.mxu0 %v880
        %1056 = vmatprep.subr.mxu0 0.0
        %1057 = vmatpush1.msra.mxu0 %v881
        %1058 = vmatprep.subr.mxu0 0.0
        %1059 = vmatpush1.msra.mxu0 0.0
        %1060 = vmatprep.subr.mxu0 0.0
        %1061 = vmatpush1.msra.mxu0 0.0
        %1062 = vmatprep.subr.mxu0 0.0
        %1063 = vmatpush1.msra.mxu0 0.0
        %1064 = vmatprep.subr.mxu0 0.0
        %1065 = vmatpush1.msra.mxu0 0.0
        %1066 = vmatprep.subr.mxu0 0.0
        %1067 = vmatpush1.msra.mxu0 0.0
        %1068 = vmatprep.subr.mxu0 0.0
        %1069 = vmatpush1.msra.mxu0 0.0
        %1070 = vmatprep.subr.mxu0 0.0
        %1071 = vmatpush1.msra.mxu0 0.0
        %1072 = vmatprep.subr.mxu0 0.0
        %1073 = vmatpush1.msra.mxu0 0.0
        %1074 = vmatprep.subr.mxu0 0.0
        %1075 = vmatpush1.msra.mxu0 0.0
        %1076 = vmatprep.subr.mxu0 0.0
        %1077 = vmatpush1.msra.mxu0 0.0
        %1078 = vmatprep.subr.mxu0 0.0
        %1079 = vmatpush1.msra.mxu0 0.0
        %1080 = vmatprep.subr.mxu0 0.0
        %1081 = vmatpush1.msra.mxu0 0.0
        %1082 = vmatprep.subr.mxu0 0.0
        %1083 = vmatpush1.msra.mxu0 0.0
        %1084 = vmatprep.subr.mxu0 0.0
        %1085 = vmatpush1.msra.mxu0 0.0
        %1086 = vmatprep.subr.mxu0 0.0
        %1087 = vmatpush1.msra.mxu0 0.0
        %1088 = vmatprep.subr.mxu0 0.0
        %1089 = vmatpush1.msra.mxu0 0.0
        %1090 = vmatprep.subr.mxu0 0.0
        %1091 = vmatpush1.msra.mxu0 0.0
        %1092 = vmatprep.subr.mxu0 0.0
        %1093 = vmatpush1.msra.mxu0 0.0
        %1094 = vmatprep.subr.mxu0 0.0
        %1095 = vmatpush1.msra.mxu0 0.0
        %1096 = vmatprep.subr.mxu0 0.0
        %1097 = vmatpush1.msra.mxu0 0.0
        %1098 = vmatprep.subr.mxu0 0.0
        %1099 = vmatpush1.msra.mxu0 0.0
        %1100 = vmatprep.subr.mxu0 0.0
        %1101 = vmatpush1.msra.mxu0 0.0
        %1102 = vmatprep.subr.mxu0 0.0
        %1103 = vmatpush1.msra.mxu0 0.0
        %1104 = vmatprep.subr.mxu0 0.0
        %1105 = vmatpush1.msra.mxu0 0.0
        %1106 = vmatprep.subr.mxu0 0.0
        %1107 = vmatpush1.msra.mxu0 0.0
        %1108 = vmatprep.subr.mxu0 0.0
        %1109 = vmatpush1.msra.mxu0 0.0
        %1110 = vmatprep.subr.mxu0 0.0
        %1111 = vmatpush1.msra.mxu0 0.0
        %1112 = vmatprep.subr.mxu0 0.0
        %1113 = vmatpush1.msra.mxu0 0.0
        %1114 = vmatprep.subr.mxu0 0.0
        %1115 = vmatpush1.msra.mxu0 0.0
        %1116 = vmatprep.subr.mxu0 0.0
        %1117 = vmatpush1.msra.mxu0 0.0
        %1118 = vmatprep.mubr.f32.mxu0 0.0
        %1119 = vmatmul.mubr.f32.gmra.mrb[0].mxu0 %v1050
        %v1120 = vpop.f32.mrb[0].mxu0
        %v1121 = vadd.f32 0.0, %v1120
        %v1122 = vpop.f32.mrb[0].mxu0
        %1123 = vmatprep.mubr.f32.mxu0 0.0
        %1124 = vmatmul.mubr.f32.gmra.mrb[0].mxu0 %v1052
        %v1125 = vpop.f32.mrb[0].mxu0
        %v1126 = vadd.f32 0.0, %v1125
        %v1127 = vpop.f32.mrb[0].mxu0
        %1128 = vdwg.mxu0
        %1129 = vrot.lane.b32.xlu0 %v870, 80
        %v1130 = vpop.permute.xlu0 %1129
        %1131 = vrot.lane.b32.xlu0 %v876, 80
        %v1132 = vpop.permute.xlu0 %1131
        %v1133 = vsel %vm363, %v1130, 0
        %v1135 = vsel %vm363, %v1132, 0
        %1137 = vmatprep.subr.mxu0 0.0
        %1138 = vmatpush1.msra.mxu0 %v880
        %1139 = vmatprep.subr.mxu0 0.0
        %1140 = vmatpush1.msra.mxu0 %v881
        %1141 = vmatprep.subr.mxu0 0.0
        %1142 = vmatpush1.msra.mxu0 0.0
        %1143 = vmatprep.subr.mxu0 0.0
        %1144 = vmatpush1.msra.mxu0 0.0
        %1145 = vmatprep.subr.mxu0 0.0
        %1146 = vmatpush1.msra.mxu0 0.0
        %1147 = vmatprep.subr.mxu0 0.0
        %1148 = vmatpush1.msra.mxu0 0.0
        %1149 = vmatprep.subr.mxu0 0.0
        %1150 = vmatpush1.msra.mxu0 0.0
        %1151 = vmatprep.subr.mxu0 0.0
        %1152 = vmatpush1.msra.mxu0 0.0
        %1153 = vmatprep.subr.mxu0 0.0
        %1154 = vmatpush1.msra.mxu0 0.0
        %1155 = vmatprep.subr.mxu0 0.0
        %1156 = vmatpush1.msra.mxu0 0.0
        %1157 = vmatprep.subr.mxu0 0.0
        %1158 = vmatpush1.msra.mxu0 0.0
        %1159 = vmatprep.subr.mxu0 0.0
        %1160 = vmatpush1.msra.mxu0 0.0
        %1161 = vmatprep.subr.mxu0 0.0
        %1162 = vmatpush1.msra.mxu0 0.0
        %1163 = vmatprep.subr.mxu0 0.0
        %1164 = vmatpush1.msra.mxu0 0.0
        %1165 = vmatprep.subr.mxu0 0.0
        %1166 = vmatpush1.msra.mxu0 0.0
        %1167 = vmatprep.subr.mxu0 0.0
        %1168 = vmatpush1.msra.mxu0 0.0
        %1169 = vmatprep.subr.mxu0 0.0
        %1170 = vmatpush1.msra.mxu0 0.0
        %1171 = vmatprep.subr.mxu0 0.0
        %1172 = vmatpush1.msra.mxu0 0.0
        %1173 = vmatprep.subr.mxu0 0.0
        %1174 = vmatpush1.msra.mxu0 0.0
        %1175 = vmatprep.subr.mxu0 0.0
        %1176 = vmatpush1.msra.mxu0 0.0
        %1177 = vmatprep.subr.mxu0 0.0
        %1178 = vmatpush1.msra.mxu0 0.0
        %1179 = vmatprep.subr.mxu0 0.0
        %1180 = vmatpush1.msra.mxu0 0.0
        %1181 = vmatprep.subr.mxu0 0.0
        %1182 = vmatpush1.msra.mxu0 0.0
        %1183 = vmatprep.subr.mxu0 0.0
        %1184 = vmatpush1.msra.mxu0 0.0
        %1185 = vmatprep.subr.mxu0 0.0
        %1186 = vmatpush1.msra.mxu0 0.0
        %1187 = vmatprep.subr.mxu0 0.0
        %1188 = vmatpush1.msra.mxu0 0.0
        %1189 = vmatprep.subr.mxu0 0.0
        %1190 = vmatpush1.msra.mxu0 0.0
        %1191 = vmatprep.subr.mxu0 0.0
        %1192 = vmatpush1.msra.mxu0 0.0
        %1193 = vmatprep.subr.mxu0 0.0
        %1194 = vmatpush1.msra.mxu0 0.0
        %1195 = vmatprep.subr.mxu0 0.0
        %1196 = vmatpush1.msra.mxu0 0.0
        %1197 = vmatprep.subr.mxu0 0.0
        %1198 = vmatpush1.msra.mxu0 0.0
        %1199 = vmatprep.subr.mxu0 0.0
        %1200 = vmatpush1.msra.mxu0 0.0
        %1201 = vmatprep.mubr.f32.mxu0 0.0
        %1202 = vmatmul.mubr.f32.gmra.mrb[0].mxu0 %v1133
        %v1203 = vpop.f32.mrb[0].mxu0
        %v1204 = vadd.f32 0.0, %v1203
        %v1205 = vpop.f32.mrb[0].mxu0
        %1206 = vmatprep.mubr.f32.mxu0 0.0
        %1207 = vmatmul.mubr.f32.gmra.mrb[0].mxu0 %v1135
        %v1208 = vpop.f32.mrb[0].mxu0
        %v1209 = vadd.f32 0.0, %v1208
        %v1210 = vpop.f32.mrb[0].mxu0
        %1211 = vdwg.mxu0
        %1212 = vrot.lane.b32.xlu0 %v870, 64
        %v1213 = vpop.permute.xlu0 %1212
        %1214 = vrot.lane.b32.xlu0 %v876, 64
        %v1215 = vpop.permute.xlu0 %1214
        %v1216 = vsel %vm363, %v1213, 0
        %v1218 = vsel %vm363, %v1215, 0
        %1220 = vmatprep.subr.mxu0 0.0
        %1221 = vmatpush1.msra.mxu0 %v880
        %1222 = vmatprep.subr.mxu0 0.0
        %1223 = vmatpush1.msra.mxu0 %v881
        %1224 = vmatprep.subr.mxu0 0.0
        %1225 = vmatpush1.msra.mxu0 0.0
        %1226 = vmatprep.subr.mxu0 0.0
        %1227 = vmatpush1.msra.mxu0 0.0
        %1228 = vmatprep.subr.mxu0 0.0
        %1229 = vmatpush1.msra.mxu0 0.0
        %1230 = vmatprep.subr.mxu0 0.0
        %1231 = vmatpush1.msra.mxu0 0.0
        %1232 = vmatprep.subr.mxu0 0.0
        %1233 = vmatpush1.msra.mxu0 0.0
        %1234 = vmatprep.subr.mxu0 0.0
        %1235 = vmatpush1.msra.mxu0 0.0
        %1236 = vmatprep.subr.mxu0 0.0
        %1237 = vmatpush1.msra.mxu0 0.0
        %1238 = vmatprep.subr.mxu0 0.0
        %1239 = vmatpush1.msra.mxu0 0.0
        %1240 = vmatprep.subr.mxu0 0.0
        %1241 = vmatpush1.msra.mxu0 0.0
        %1242 = vmatprep.subr.mxu0 0.0
        %1243 = vmatpush1.msra.mxu0 0.0
        %1244 = vmatprep.subr.mxu0 0.0
        %1245 = vmatpush1.msra.mxu0 0.0
        %1246 = vmatprep.subr.mxu0 0.0
        %1247 = vmatpush1.msra.mxu0 0.0
        %1248 = vmatprep.subr.mxu0 0.0
        %1249 = vmatpush1.msra.mxu0 0.0
        %1250 = vmatprep.subr.mxu0 0.0
        %1251 = vmatpush1.msra.mxu0 0.0
        %1252 = vmatprep.subr.mxu0 0.0
        %1253 = vmatpush1.msra.mxu0 0.0
        %1254 = vmatprep.subr.mxu0 0.0
        %1255 = vmatpush1.msra.mxu0 0.0
        %1256 = vmatprep.subr.mxu0 0.0
        %1257 = vmatpush1.msra.mxu0 0.0
        %1258 = vmatprep.subr.mxu0 0.0
        %1259 = vmatpush1.msra.mxu0 0.0
        %1260 = vmatprep.subr.mxu0 0.0
        %1261 = vmatpush1.msra.mxu0 0.0
        %1262 = vmatprep.subr.mxu0 0.0
        %1263 = vmatpush1.msra.mxu0 0.0
        %1264 = vmatprep.subr.mxu0 0.0
        %1265 = vmatpush1.msra.mxu0 0.0
        %1266 = vmatprep.subr.mxu0 0.0
        %1267 = vmatpush1.msra.mxu0 0.0
        %1268 = vmatprep.subr.mxu0 0.0
        %1269 = vmatpush1.msra.mxu0 0.0
        %1270 = vmatprep.subr.mxu0 0.0
        %1271 = vmatpush1.msra.mxu0 0.0
        %1272 = vmatprep.subr.mxu0 0.0
        %1273 = vmatpush1.msra.mxu0 0.0
        %1274 = vmatprep.subr.mxu0 0.0
        %1275 = vmatpush1.msra.mxu0 0.0
        %1276 = vmatprep.subr.mxu0 0.0
        %1277 = vmatpush1.msra.mxu0 0.0
        %1278 = vmatprep.subr.mxu0 0.0
        %1279 = vmatpush1.msra.mxu0 0.0
        %1280 = vmatprep.subr.mxu0 0.0
        %1281 = vmatpush1.msra.mxu0 0.0
        %1282 = vmatprep.subr.mxu0 0.0
        %1283 = vmatpush1.msra.mxu0 0.0
        %1284 = vmatprep.mubr.f32.mxu0 0.0
        %1285 = vmatmul.mubr.f32.gmra.mrb[0].mxu0 %v1216
        %v1286 = vpop.f32.mrb[0].mxu0
        %v1287 = vadd.f32 0.0, %v1286
        %v1288 = vpop.f32.mrb[0].mxu0
        %1289 = vmatprep.mubr.f32.mxu0 0.0
        %1290 = vmatmul.mubr.f32.gmra.mrb[0].mxu0 %v1218
        %v1291 = vpop.f32.mrb[0].mxu0
        %v1292 = vadd.f32 0.0, %v1291
        %v1293 = vpop.f32.mrb[0].mxu0
        %1294 = vdwg.mxu0
        %1295 = vrot.lane.b32.xlu0 %v870, 48
        %v1296 = vpop.permute.xlu0 %1295
        %1297 = vrot.lane.b32.xlu0 %v876, 48
        %v1298 = vpop.permute.xlu0 %1297
        %v1299 = vsel %vm363, %v1296, 0
        %v1301 = vsel %vm363, %v1298, 0
        %1303 = vmatprep.subr.mxu0 0.0
        %1304 = vmatpush1.msra.mxu0 %v880
        %1305 = vmatprep.subr.mxu0 0.0
        %1306 = vmatpush1.msra.mxu0 %v881
        %1307 = vmatprep.subr.mxu0 0.0
        %1308 = vmatpush1.msra.mxu0 0.0
        %1309 = vmatprep.subr.mxu0 0.0
        %1310 = vmatpush1.msra.mxu0 0.0
        %1311 = vmatprep.subr.mxu0 0.0
        %1312 = vmatpush1.msra.mxu0 0.0
        %1313 = vmatprep.subr.mxu0 0.0
        %1314 = vmatpush1.msra.mxu0 0.0
        %1315 = vmatprep.subr.mxu0 0.0
        %1316 = vmatpush1.msra.mxu0 0.0
        %1317 = vmatprep.subr.mxu0 0.0
        %1318 = vmatpush1.msra.mxu0 0.0
        %1319 = vmatprep.subr.mxu0 0.0
        %1320 = vmatpush1.msra.mxu0 0.0
        %1321 = vmatprep.subr.mxu0 0.0
        %1322 = vmatpush1.msra.mxu0 0.0
        %1323 = vmatprep.subr.mxu0 0.0
        %1324 = vmatpush1.msra.mxu0 0.0
        %1325 = vmatprep.subr.mxu0 0.0
        %1326 = vmatpush1.msra.mxu0 0.0
        %1327 = vmatprep.subr.mxu0 0.0
        %1328 = vmatpush1.msra.mxu0 0.0
        %1329 = vmatprep.subr.mxu0 0.0
        %1330 = vmatpush1.msra.mxu0 0.0
        %1331 = vmatprep.subr.mxu0 0.0
        %1332 = vmatpush1.msra.mxu0 0.0
        %1333 = vmatprep.subr.mxu0 0.0
        %1334 = vmatpush1.msra.mxu0 0.0
        %1335 = vmatprep.subr.mxu0 0.0
        %1336 = vmatpush1.msra.mxu0 0.0
        %1337 = vmatprep.subr.mxu0 0.0
        %1338 = vmatpush1.msra.mxu0 0.0
        %1339 = vmatprep.subr.mxu0 0.0
        %1340 = vmatpush1.msra.mxu0 0.0
        %1341 = vmatprep.subr.mxu0 0.0
        %1342 = vmatpush1.msra.mxu0 0.0
        %1343 = vmatprep.subr.mxu0 0.0
        %1344 = vmatpush1.msra.mxu0 0.0
        %1345 = vmatprep.subr.mxu0 0.0
        %1346 = vmatpush1.msra.mxu0 0.0
        %1347 = vmatprep.subr.mxu0 0.0
        %1348 = vmatpush1.msra.mxu0 0.0
        %1349 = vmatprep.subr.mxu0 0.0
        %1350 = vmatpush1.msra.mxu0 0.0
        %1351 = vmatprep.subr.mxu0 0.0
        %1352 = vmatpush1.msra.mxu0 0.0
        %1353 = vmatprep.subr.mxu0 0.0
        %1354 = vmatpush1.msra.mxu0 0.0
        %1355 = vmatprep.subr.mxu0 0.0
        %1356 = vmatpush1.msra.mxu0 0.0
        %1357 = vmatprep.subr.mxu0 0.0
        %1358 = vmatpush1.msra.mxu0 0.0
        %1359 = vmatprep.subr.mxu0 0.0
        %1360 = vmatpush1.msra.mxu0 0.0
        %1361 = vmatprep.subr.mxu0 0.0
        %1362 = vmatpush1.msra.mxu0 0.0
        %1363 = vmatprep.subr.mxu0 0.0
        %1364 = vmatpush1.msra.mxu0 0.0
        %1365 = vmatprep.subr.mxu0 0.0
        %1366 = vmatpush1.msra.mxu0 0.0
        %1367 = vmatprep.mubr.f32.mxu0 0.0
        %1368 = vmatmul.mubr.f32.gmra.mrb[0].mxu0 %v1299
        %v1369 = vpop.f32.mrb[0].mxu0
        %v1370 = vadd.f32 0.0, %v1369
        %v1371 = vpop.f32.mrb[0].mxu0
        %1372 = vmatprep.mubr.f32.mxu0 0.0
        %1373 = vmatmul.mubr.f32.gmra.mrb[0].mxu0 %v1301
        %v1374 = vpop.f32.mrb[0].mxu0
        %v1375 = vadd.f32 0.0, %v1374
        %v1376 = vpop.f32.mrb[0].mxu0
        %1377 = vdwg.mxu0
        %1378 = vrot.lane.b32.xlu0 %v870, 32
        %v1379 = vpop.permute.xlu0 %1378
        %1380 = vrot.lane.b32.xlu0 %v876, 32
        %v1381 = vpop.permute.xlu0 %1380
        %v1382 = vsel %vm363, %v1379, 0
        %v1384 = vsel %vm363, %v1381, 0
        %1386 = vmatprep.subr.mxu0 0.0
        %1387 = vmatpush1.msra.mxu0 %v880
        %1388 = vmatprep.subr.mxu0 0.0
        %1389 = vmatpush1.msra.mxu0 %v881
        %1390 = vmatprep.subr.mxu0 0.0
        %1391 = vmatpush1.msra.mxu0 0.0
        %1392 = vmatprep.subr.mxu0 0.0
        %1393 = vmatpush1.msra.mxu0 0.0
        %1394 = vmatprep.subr.mxu0 0.0
        %1395 = vmatpush1.msra.mxu0 0.0
        %1396 = vmatprep.subr.mxu0 0.0
        %1397 = vmatpush1.msra.mxu0 0.0
        %1398 = vmatprep.subr.mxu0 0.0
        %1399 = vmatpush1.msra.mxu0 0.0
        %1400 = vmatprep.subr.mxu0 0.0
        %1401 = vmatpush1.msra.mxu0 0.0
        %1402 = vmatprep.subr.mxu0 0.0
        %1403 = vmatpush1.msra.mxu0 0.0
        %1404 = vmatprep.subr.mxu0 0.0
        %1405 = vmatpush1.msra.mxu0 0.0
        %1406 = vmatprep.subr.mxu0 0.0
        %1407 = vmatpush1.msra.mxu0 0.0
        %1408 = vmatprep.subr.mxu0 0.0
        %1409 = vmatpush1.msra.mxu0 0.0
        %1410 = vmatprep.subr.mxu0 0.0
        %1411 = vmatpush1.msra.mxu0 0.0
        %1412 = vmatprep.subr.mxu0 0.0
        %1413 = vmatpush1.msra.mxu0 0.0
        %1414 = vmatprep.subr.mxu0 0.0
        %1415 = vmatpush1.msra.mxu0 0.0
        %1416 = vmatprep.subr.mxu0 0.0
        %1417 = vmatpush1.msra.mxu0 0.0
        %1418 = vmatprep.subr.mxu0 0.0
        %1419 = vmatpush1.msra.mxu0 0.0
        %1420 = vmatprep.subr.mxu0 0.0
        %1421 = vmatpush1.msra.mxu0 0.0
        %1422 = vmatprep.subr.mxu0 0.0
        %1423 = vmatpush1.msra.mxu0 0.0
        %1424 = vmatprep.subr.mxu0 0.0
        %1425 = vmatpush1.msra.mxu0 0.0
        %1426 = vmatprep.subr.mxu0 0.0
        %1427 = vmatpush1.msra.mxu0 0.0
        %1428 = vmatprep.subr.mxu0 0.0
        %1429 = vmatpush1.msra.mxu0 0.0
        %1430 = vmatprep.subr.mxu0 0.0
        %1431 = vmatpush1.msra.mxu0 0.0
        %1432 = vmatprep.subr.mxu0 0.0
        %1433 = vmatpush1.msra.mxu0 0.0
        %1434 = vmatprep.subr.mxu0 0.0
        %1435 = vmatpush1.msra.mxu0 0.0
        %1436 = vmatprep.subr.mxu0 0.0
        %1437 = vmatpush1.msra.mxu0 0.0
        %1438 = vmatprep.subr.mxu0 0.0
        %1439 = vmatpush1.msra.mxu0 0.0
        %1440 = vmatprep.subr.mxu0 0.0
        %1441 = vmatpush1.msra.mxu0 0.0
        %1442 = vmatprep.subr.mxu0 0.0
        %1443 = vmatpush1.msra.mxu0 0.0
        %1444 = vmatprep.subr.mxu0 0.0
        %1445 = vmatpush1.msra.mxu0 0.0
        %1446 = vmatprep.subr.mxu0 0.0
        %1447 = vmatpush1.msra.mxu0 0.0
        %1448 = vmatprep.subr.mxu0 0.0
        %1449 = vmatpush1.msra.mxu0 0.0
        %1450 = vmatprep.mubr.f32.mxu0 0.0
        %1451 = vmatmul.mubr.f32.gmra.mrb[0].mxu0 %v1382
        %v1452 = vpop.f32.mrb[0].mxu0
        %v1453 = vadd.f32 0.0, %v1452
        %v1454 = vpop.f32.mrb[0].mxu0
        %1455 = vmatprep.mubr.f32.mxu0 0.0
        %1456 = vmatmul.mubr.f32.gmra.mrb[0].mxu0 %v1384
        %v1457 = vpop.f32.mrb[0].mxu0
        %v1458 = vadd.f32 0.0, %v1457
        %v1459 = vpop.f32.mrb[0].mxu0
        %1460 = vdwg.mxu0
        %1461 = vrot.lane.b32.xlu0 %v870, 16
        %v1462 = vpop.permute.xlu0 %1461
        %1463 = vrot.lane.b32.xlu0 %v876, 16
        %v1464 = vpop.permute.xlu0 %1463
        %v1465 = vsel %vm363, %v1462, 0
        %v1467 = vsel %vm363, %v1464, 0
        %1469 = vmatprep.subr.mxu0 0.0
        %1470 = vmatpush1.msra.mxu0 %v880
        %1471 = vmatprep.subr.mxu0 0.0
        %1472 = vmatpush1.msra.mxu0 %v881
        %1473 = vmatprep.subr.mxu0 0.0
        %1474 = vmatpush1.msra.mxu0 0.0
        %1475 = vmatprep.subr.mxu0 0.0
        %1476 = vmatpush1.msra.mxu0 0.0
        %1477 = vmatprep.subr.mxu0 0.0
        %1478 = vmatpush1.msra.mxu0 0.0
        %1479 = vmatprep.subr.mxu0 0.0
        %1480 = vmatpush1.msra.mxu0 0.0
        %1481 = vmatprep.subr.mxu0 0.0
        %1482 = vmatpush1.msra.mxu0 0.0
        %1483 = vmatprep.subr.mxu0 0.0
        %1484 = vmatpush1.msra.mxu0 0.0
        %1485 = vmatprep.subr.mxu0 0.0
        %1486 = vmatpush1.msra.mxu0 0.0
        %1487 = vmatprep.subr.mxu0 0.0
        %1488 = vmatpush1.msra.mxu0 0.0
        %1489 = vmatprep.subr.mxu0 0.0
        %1490 = vmatpush1.msra.mxu0 0.0
        %1491 = vmatprep.subr.mxu0 0.0
        %1492 = vmatpush1.msra.mxu0 0.0
        %1493 = vmatprep.subr.mxu0 0.0
        %1494 = vmatpush1.msra.mxu0 0.0
        %1495 = vmatprep.subr.mxu0 0.0
        %1496 = vmatpush1.msra.mxu0 0.0
        %1497 = vmatprep.subr.mxu0 0.0
        %1498 = vmatpush1.msra.mxu0 0.0
        %1499 = vmatprep.subr.mxu0 0.0
        %1500 = vmatpush1.msra.mxu0 0.0
        %1501 = vmatprep.subr.mxu0 0.0
        %1502 = vmatpush1.msra.mxu0 0.0
        %1503 = vmatprep.subr.mxu0 0.0
        %1504 = vmatpush1.msra.mxu0 0.0
        %1505 = vmatprep.subr.mxu0 0.0
        %1506 = vmatpush1.msra.mxu0 0.0
        %1507 = vmatprep.subr.mxu0 0.0
        %1508 = vmatpush1.msra.mxu0 0.0
        %1509 = vmatprep.subr.mxu0 0.0
        %1510 = vmatpush1.msra.mxu0 0.0
        %1511 = vmatprep.subr.mxu0 0.0
        %1512 = vmatpush1.msra.mxu0 0.0
        %1513 = vmatprep.subr.mxu0 0.0
        %1514 = vmatpush1.msra.mxu0 0.0
        %1515 = vmatprep.subr.mxu0 0.0
        %1516 = vmatpush1.msra.mxu0 0.0
        %1517 = vmatprep.subr.mxu0 0.0
        %1518 = vmatpush1.msra.mxu0 0.0
        %1519 = vmatprep.subr.mxu0 0.0
        %1520 = vmatpush1.msra.mxu0 0.0
        %1521 = vmatprep.subr.mxu0 0.0
        %1522 = vmatpush1.msra.mxu0 0.0
        %1523 = vmatprep.subr.mxu0 0.0
        %1524 = vmatpush1.msra.mxu0 0.0
        %1525 = vmatprep.subr.mxu0 0.0
        %1526 = vmatpush1.msra.mxu0 0.0
        %1527 = vmatprep.subr.mxu0 0.0
        %1528 = vmatpush1.msra.mxu0 0.0
        %1529 = vmatprep.subr.mxu0 0.0
        %1530 = vmatpush1.msra.mxu0 0.0
        %1531 = vmatprep.subr.mxu0 0.0
        %1532 = vmatpush1.msra.mxu0 0.0
        %1533 = vmatprep.mubr.f32.mxu0 0.0
        %1534 = vmatmul.mubr.f32.gmra.mrb[0].mxu0 %v1465
        %v1535 = vpop.f32.mrb[0].mxu0
        %v1536 = vadd.f32 0.0, %v1535
        %v1537 = vpop.f32.mrb[0].mxu0
        %1538 = vmatprep.mubr.f32.mxu0 0.0
        %1539 = vmatmul.mubr.f32.gmra.mrb[0].mxu0 %v1467
        %v1540 = vpop.f32.mrb[0].mxu0
        %v1541 = vadd.f32 0.0, %v1540
        %v1542 = vpop.f32.mrb[0].mxu0
        %1543 = vdwg.mxu0
        %v1545 = vsel %vm363, %v872, 0
        %v1548 = vsel %vm363, %v878, 0
        %1550 = vmatprep.subr.mxu0 0.0
        %1551 = vmatpush1.msra.mxu0 %v880
        %1552 = vmatprep.subr.mxu0 0.0
        %1553 = vmatpush1.msra.mxu0 %v881
        %1554 = vmatprep.subr.mxu0 0.0
        %1555 = vmatpush1.msra.mxu0 0.0
        %1556 = vmatprep.subr.mxu0 0.0
        %1557 = vmatpush1.msra.mxu0 0.0
        %1558 = vmatprep.subr.mxu0 0.0
        %1559 = vmatpush1.msra.mxu0 0.0
        %1560 = vmatprep.subr.mxu0 0.0
        %1561 = vmatpush1.msra.mxu0 0.0
        %1562 = vmatprep.subr.mxu0 0.0
        %1563 = vmatpush1.msra.mxu0 0.0
        %1564 = vmatprep.subr.mxu0 0.0
        %1565 = vmatpush1.msra.mxu0 0.0
        %1566 = vmatprep.subr.mxu0 0.0
        %1567 = vmatpush1.msra.mxu0 0.0
        %1568 = vmatprep.subr.mxu0 0.0
        %1569 = vmatpush1.msra.mxu0 0.0
        %1570 = vmatprep.subr.mxu0 0.0
        %1571 = vmatpush1.msra.mxu0 0.0
        %1572 = vmatprep.subr.mxu0 0.0
        %1573 = vmatpush1.msra.mxu0 0.0
        %1574 = vmatprep.subr.mxu0 0.0
        %1575 = vmatpush1.msra.mxu0 0.0
        %1576 = vmatprep.subr.mxu0 0.0
        %1577 = vmatpush1.msra.mxu0 0.0
        %1578 = vmatprep.subr.mxu0 0.0
        %1579 = vmatpush1.msra.mxu0 0.0
        %1580 = vmatprep.subr.mxu0 0.0
        %1581 = vmatpush1.msra.mxu0 0.0
        %1582 = vmatprep.subr.mxu0 0.0
        %1583 = vmatpush1.msra.mxu0 0.0
        %1584 = vmatprep.subr.mxu0 0.0
        %1585 = vmatpush1.msra.mxu0 0.0
        %1586 = vmatprep.subr.mxu0 0.0
        %1587 = vmatpush1.msra.mxu0 0.0
        %1588 = vmatprep.subr.mxu0 0.0
        %1589 = vmatpush1.msra.mxu0 0.0
        %1590 = vmatprep.subr.mxu0 0.0
        %1591 = vmatpush1.msra.mxu0 0.0
        %1592 = vmatprep.subr.mxu0 0.0
        %1593 = vmatpush1.msra.mxu0 0.0
        %1594 = vmatprep.subr.mxu0 0.0
        %1595 = vmatpush1.msra.mxu0 0.0
        %1596 = vmatprep.subr.mxu0 0.0
        %1597 = vmatpush1.msra.mxu0 0.0
        %1598 = vmatprep.subr.mxu0 0.0
        %1599 = vmatpush1.msra.mxu0 0.0
        %1600 = vmatprep.subr.mxu0 0.0
        %1601 = vmatpush1.msra.mxu0 0.0
        %1602 = vmatprep.subr.mxu0 0.0
        %1603 = vmatpush1.msra.mxu0 0.0
        %1604 = vmatprep.subr.mxu0 0.0
        %1605 = vmatpush1.msra.mxu0 0.0
        %1606 = vmatprep.subr.mxu0 0.0
        %1607 = vmatpush1.msra.mxu0 0.0
        %1608 = vmatprep.subr.mxu0 0.0
        %1609 = vmatpush1.msra.mxu0 0.0
        %1610 = vmatprep.subr.mxu0 0.0
        %1611 = vmatpush1.msra.mxu0 0.0
        %1612 = vmatprep.subr.mxu0 0.0
        %1613 = vmatpush1.msra.mxu0 0.0
        %1614 = vmatprep.mubr.f32.mxu0 0.0
        %1615 = vmatmul.mubr.f32.gmra.mrb[0].mxu0 %v1545
        %v1616 = vpop.f32.mrb[0].mxu0
        %v1617 = vadd.f32 0.0, %v1616
        %v1618 = vpop.f32.mrb[0].mxu0
        %1619 = vmatprep.mubr.f32.mxu0 0.0
        %1620 = vmatmul.mubr.f32.gmra.mrb[0].mxu0 %v1548
        %v1621 = vpop.f32.mrb[0].mxu0
        %v1622 = vadd.f32 0.0, %v1621
        %v1623 = vpop.f32.mrb[0].mxu0
        %1624 = vdwg.mxu0
        %1625 = vrot.lane.b32.xlu0 %v872, 112
        %v1626 = vpop.permute.xlu0 %1625
        %1627 = vrot.lane.b32.xlu0 %v878, 112
        %v1628 = vpop.permute.xlu0 %1627
        %v1629 = vsel %vm363, %v1626, 0
        %v1631 = vsel %vm363, %v1628, 0
        %1633 = vmatprep.subr.mxu0 0.0
        %1634 = vmatpush1.msra.mxu0 %v880
        %1635 = vmatprep.subr.mxu0 0.0
        %1636 = vmatpush1.msra.mxu0 %v881
        %1637 = vmatprep.subr.mxu0 0.0
        %1638 = vmatpush1.msra.mxu0 0.0
        %1639 = vmatprep.subr.mxu0 0.0
        %1640 = vmatpush1.msra.mxu0 0.0
        %1641 = vmatprep.subr.mxu0 0.0
        %1642 = vmatpush1.msra.mxu0 0.0
        %1643 = vmatprep.subr.mxu0 0.0
        %1644 = vmatpush1.msra.mxu0 0.0
        %1645 = vmatprep.subr.mxu0 0.0
        %1646 = vmatpush1.msra.mxu0 0.0
        %1647 = vmatprep.subr.mxu0 0.0
        %1648 = vmatpush1.msra.mxu0 0.0
        %1649 = vmatprep.subr.mxu0 0.0
        %1650 = vmatpush1.msra.mxu0 0.0
        %1651 = vmatprep.subr.mxu0 0.0
        %1652 = vmatpush1.msra.mxu0 0.0
        %1653 = vmatprep.subr.mxu0 0.0
        %1654 = vmatpush1.msra.mxu0 0.0
        %1655 = vmatprep.subr.mxu0 0.0
        %1656 = vmatpush1.msra.mxu0 0.0
        %1657 = vmatprep.subr.mxu0 0.0
        %1658 = vmatpush1.msra.mxu0 0.0
        %1659 = vmatprep.subr.mxu0 0.0
        %1660 = vmatpush1.msra.mxu0 0.0
        %1661 = vmatprep.subr.mxu0 0.0
        %1662 = vmatpush1.msra.mxu0 0.0
        %1663 = vmatprep.subr.mxu0 0.0
        %1664 = vmatpush1.msra.mxu0 0.0
        %1665 = vmatprep.subr.mxu0 0.0
        %1666 = vmatpush1.msra.mxu0 0.0
        %1667 = vmatprep.subr.mxu0 0.0
        %1668 = vmatpush1.msra.mxu0 0.0
        %1669 = vmatprep.subr.mxu0 0.0
        %1670 = vmatpush1.msra.mxu0 0.0
        %1671 = vmatprep.subr.mxu0 0.0
        %1672 = vmatpush1.msra.mxu0 0.0
        %1673 = vmatprep.subr.mxu0 0.0
        %1674 = vmatpush1.msra.mxu0 0.0
        %1675 = vmatprep.subr.mxu0 0.0
        %1676 = vmatpush1.msra.mxu0 0.0
        %1677 = vmatprep.subr.mxu0 0.0
        %1678 = vmatpush1.msra.mxu0 0.0
        %1679 = vmatprep.subr.mxu0 0.0
        %1680 = vmatpush1.msra.mxu0 0.0
        %1681 = vmatprep.subr.mxu0 0.0
        %1682 = vmatpush1.msra.mxu0 0.0
        %1683 = vmatprep.subr.mxu0 0.0
        %1684 = vmatpush1.msra.mxu0 0.0
        %1685 = vmatprep.subr.mxu0 0.0
        %1686 = vmatpush1.msra.mxu0 0.0
        %1687 = vmatprep.subr.mxu0 0.0
        %1688 = vmatpush1.msra.mxu0 0.0
        %1689 = vmatprep.subr.mxu0 0.0
        %1690 = vmatpush1.msra.mxu0 0.0
        %1691 = vmatprep.subr.mxu0 0.0
        %1692 = vmatpush1.msra.mxu0 0.0
        %1693 = vmatprep.subr.mxu0 0.0
        %1694 = vmatpush1.msra.mxu0 0.0
        %1695 = vmatprep.subr.mxu0 0.0
        %1696 = vmatpush1.msra.mxu0 0.0
        %1697 = vmatprep.mubr.f32.mxu0 0.0
        %1698 = vmatmul.mubr.f32.gmra.mrb[0].mxu0 %v1629
        %v1699 = vpop.f32.mrb[0].mxu0
        %v1700 = vadd.f32 0.0, %v1699
        %v1701 = vpop.f32.mrb[0].mxu0
        %1702 = vmatprep.mubr.f32.mxu0 0.0
        %1703 = vmatmul.mubr.f32.gmra.mrb[0].mxu0 %v1631
        %v1704 = vpop.f32.mrb[0].mxu0
        %v1705 = vadd.f32 0.0, %v1704
        %v1706 = vpop.f32.mrb[0].mxu0
        %1707 = vdwg.mxu0
        %v1708 = vmul.f32 %v955, %v955
        %v1709 = vmul.f32 %v960, %v960
        %v1710 = vmul.f32 %v1038, %v1038
        %v1711 = vmul.f32 %v1043, %v1043
        %v1712 = vmul.f32 %v955, %v1038
        %v1713 = vmul.f32 %v960, %v1043
        %v1714 = vsub.f32 %v1121, %v1708
        %v1715 = vsub.f32 %v1126, %v1709
        %v1716 = vsub.f32 %v1204, %v1710
        %v1717 = vsub.f32 %v1209, %v1711
        %v1718 = vsub.f32 %v1287, %v1712
        %v1719 = vsub.f32 %v1292, %v1713
        %v1720 = vmul.f32 %v1712, 2.0
        %v1721 = vmul.f32 %v1713, 2.0
        %v1722 = vadd.f32 %v1720, 0.0001
        %v1723 = vadd.f32 %v1721, 0.0001
        %v1724 = vmul.f32 %v1718, 2.0
        %v1725 = vmul.f32 %v1719, 2.0
        %v1726 = vadd.f32 %v1724, 0.0009
        %v1727 = vadd.f32 %v1725, 0.0009
        %v1728 = vmul.f32 %v1722, %v1726
        %v1729 = vmul.f32 %v1723, %v1727
        %v1730 = vadd.f32 %v1708, %v1710
        %v1731 = vadd.f32 %v1709, %v1711
        %v1732 = vadd.f32 %v1730, 0.0001
        %v1733 = vadd.f32 %v1731, 0.0001
        %v1734 = vadd.f32 %v1714, %v1716
        %v1735 = vadd.f32 %v1715, %v1717
        %v1736 = vadd.f32 %v1734, 0.0009
        %v1737 = vadd.f32 %v1735, 0.0009
        %v1738 = vmul.f32 %v1732, %v1736
        %v1739 = vmul.f32 %v1733, %v1737
        %v1740 = vrcp.pop %v1738
        %v1741 = vrcp.pop %v1739
        %v1742 = vmul.f32 %v1738, %v1740
        %v1743 = vmul.f32 %v1739, %v1741
        %v1744 = vsub.f32 2.0, %v1742
        %v1745 = vsub.f32 2.0, %v1743
        %v1746 = vmul.f32 %v1740, %v1744
        %v1747 = vmul.f32 %v1741, %v1745
        %v1748 = vmul.f32 %v1728, %v1746
        %v1749 = vmul.f32 %v1729, %v1747
        %v1750 = vsub.f32 1.0, %v1748
        %v1751 = vsub.f32 1.0, %v1749
        %v1752 = vmul.f32 %v1750, 0.5
        %v1753 = vmul.f32 %v1751, 0.5
        %v1754 = vmax.f32 %v1752, 0.0
        %v1755 = vmax.f32 %v1753, 0.0
        %v1756 = vmin.f32 %v1754, 1.0
        %v1757 = vmin.f32 %v1755, 1.0
        %v1758 = vsel %vm363, %v1756, 0.0
        %1759 = vadd.xlane.f32.xlu0 %v1758
        %v1760 = vpop.xlane.xlu0 %1759
        %v1761 = vsel %vm363, %v1757, 0.0
        %1762 = vadd.xlane.f32.xlu0 %v1761
        %v1763 = vpop.xlane.xlu0 %1762
        %v1764 = vadd.f32 %v1760, %v1763
        %v1765 = vrot.slane %v1764, 4
        %v1766 = vadd.f32 %v1764, %v1765
        %v1767 = vrot.slane %v1766, 2
        %v1768 = vadd.f32 %v1766, %v1767
        %v1769 = vrot.slane %v1768, 1
        %v1770 = vadd.f32 %v1768, %v1769
        %v1771 = vmul.f32 %v1370, %v1370
        %v1772 = vmul.f32 %v1375, %v1375
        %v1773 = vmul.f32 %v1453, %v1453
        %v1774 = vmul.f32 %v1458, %v1458
        %v1775 = vmul.f32 %v1370, %v1453
        %v1776 = vmul.f32 %v1375, %v1458
        %v1777 = vsub.f32 %v1536, %v1771
        %v1778 = vsub.f32 %v1541, %v1772
        %v1779 = vsub.f32 %v1617, %v1773
        %v1780 = vsub.f32 %v1622, %v1774
        %v1781 = vsub.f32 %v1700, %v1775
        %v1782 = vsub.f32 %v1705, %v1776
        %v1783 = vmul.f32 %v1775, 2.0
        %v1784 = vmul.f32 %v1776, 2.0
        %v1785 = vadd.f32 %v1783, 6.5025
        %v1786 = vadd.f32 %v1784, 6.5025
        %v1787 = vmul.f32 %v1781, 2.0
        %v1788 = vmul.f32 %v1782, 2.0
        %v1789 = vadd.f32 %v1787, 58.5225
        %v1790 = vadd.f32 %v1788, 58.5225
        %v1791 = vmul.f32 %v1785, %v1789
        %v1792 = vmul.f32 %v1786, %v1790
        %v1793 = vadd.f32 %v1771, %v1773
        %v1794 = vadd.f32 %v1772, %v1774
        %v1795 = vadd.f32 %v1793, 6.5025
        %v1796 = vadd.f32 %v1794, 6.5025
        %v1797 = vadd.f32 %v1777, %v1779
        %v1798 = vadd.f32 %v1778, %v1780
        %v1799 = vadd.f32 %v1797, 58.5225
        %v1800 = vadd.f32 %v1798, 58.5225
        %v1801 = vmul.f32 %v1795, %v1799
        %v1802 = vmul.f32 %v1796, %v1800
        %v1803 = vrcp.pop %v1801
        %v1804 = vrcp.pop %v1802
        %v1805 = vmul.f32 %v1801, %v1803
        %v1806 = vmul.f32 %v1802, %v1804
        %v1807 = vsub.f32 2.0, %v1805
        %v1808 = vsub.f32 2.0, %v1806
        %v1809 = vmul.f32 %v1803, %v1807
        %v1810 = vmul.f32 %v1804, %v1808
        %v1811 = vmul.f32 %v1791, %v1809
        %v1812 = vmul.f32 %v1792, %v1810
        %v1813 = vsub.f32 1.0, %v1811
        %v1814 = vsub.f32 1.0, %v1812
        %v1815 = vmul.f32 %v1813, 0.5
        %v1816 = vmul.f32 %v1814, 0.5
        %v1817 = vmax.f32 %v1815, 0.0
        %v1818 = vmax.f32 %v1816, 0.0
        %v1819 = vmin.f32 %v1817, 1.0
        %v1820 = vmin.f32 %v1818, 1.0
        %v1821 = vsel %vm363, %v1819, 0.0
        %1822 = vadd.xlane.f32.xlu0 %v1821
        %v1823 = vpop.xlane.xlu0 %1822
        %v1824 = vsel %vm363, %v1820, 0.0
        %1825 = vadd.xlane.f32.xlu0 %v1824
        %v1826 = vpop.xlane.xlu0 %1825
        %v1827 = vadd.f32 %v1823, %v1826
        %v1828 = vrot.slane %v1827, 4
        %v1829 = vadd.f32 %v1827, %v1828
        %v1830 = vrot.slane %v1829, 2
        %v1831 = vadd.f32 %v1829, %v1830
        %v1832 = vrot.slane %v1831, 1
        %v1833 = vadd.f32 %v1831, %v1832
        %v1834 = vsub.f32 %v351, %v353
        %v1835 = vsub.f32 %v352, %v354
        %v1836 = vand.u32 2147483647, %v1834
        %v1837 = vand.u32 2147483647, %v1835
        %v1838 = vsel %vm363, %v1836, 0.0
        %1839 = vadd.xlane.f32.xlu0 %v1838
        %v1840 = vpop.xlane.xlu0 %1839
        %v1841 = vsel %vm363, %v1837, 0.0
        %1842 = vadd.xlane.f32.xlu0 %v1841
        %v1843 = vpop.xlane.xlu0 %1842
        %v1844 = vadd.f32 %v1840, %v1843
        %v1845 = vrot.slane %v1844, 4
        %v1846 = vadd.f32 %v1844, %v1845
        %v1847 = vrot.slane %v1846, 2
        %v1848 = vadd.f32 %v1846, %v1847
        %v1849 = vrot.slane %v1848, 1
        %v1850 = vadd.f32 %v1848, %v1849
        %v1851 = vmul.f32 %v1833, 0.85
        %v1852 = vmul.f32 %v1850, 0.9
        %v1853 = vadd.f32 %v1851, %v1852
        %v1854 = vmul.f32 %v1770, 0.9
        %v1855 = vadd.f32 %v1853, %v1854
        %vm1856 = vcmask 0
        %1857 = vst.msk [vmem:[%s350] sm:$0x1] %vm1856, %v1855
        %p1858 = scmp.lt.s32.totalorder %s24, 1
        %s1859 = scalar_select %p1858, %s24, 1
        %s1860 = scalar_lea.vmem %s6, %s1859
        // Predicated region
        $region65: #{tpu_custom_call.1} parent=43 // pred_check
          %p1861 = pneg %p178
        $region66: #{tpu_custom_call.1} parent=43 // pred_check_branch
          %1863 = sbr.rel (%p1861) target = $region68
        $region67: #{tpu_custom_call.1} parent=43 // pred_region
          _
        $region68: #{tpu_custom_call.1} parent=43 // pred_fallthru
          _
      $region44: #{tpu_custom_call.1} parent=5 // pred_fallthru
        _
      %p1864 = scmp.le.s32.totalorder 2, %s19
      // Predicated region
      $region69: #{tpu_custom_call.1} parent=5 // pred_check
        %p1865 = pneg %p1864
      $region70: #{tpu_custom_call.1} parent=5 // pred_check_branch
        %1867 = sbr.rel (%p1865) target = $region72
      $region71: #{tpu_custom_call.1} parent=5 // pred_region
        %s1868 = ssub.s32 %s19, 2
        // Predicated region
        $region73: #{tpu_custom_call.1} parent=71 // pred_check
          %p1869 = pneg %p184
        $region74: #{tpu_custom_call.1} parent=71 // pred_check_branch
          %1871 = sbr.rel (%p1869) target = $region76
        $region75: #{tpu_custom_call.1} parent=71 // pred_region
          %p1872 = scmp.lt.s32.totalorder %s25, 1
          %s1873 = scalar_select %p1872, %s25, 1
          %s1874 = scalar_lea.vmem %s6, %s1873
        $region76: #{tpu_custom_call.1} parent=71 // pred_fallthru
          _
      $region72: #{tpu_custom_call.1} parent=5 // pred_fallthru
        _
    $region6: #{tpu_custom_call.1} parent=1 // loop_footer
      %s23 = sadd.s32 1, %s19
    $region7: #{tpu_custom_call.1} parent=1 // loop_footer_branch
      %18 = sbr.rel target = $region3
    $region8: #{tpu_custom_call.1} parent=1 // loop_exit
      _
    %1875 = vsyncpa [#allocation3], 1
    %s1876 = scalar_lea.sflag [#allocation3], 1
    %1877 = vsyncpa %s1876, 1
    %1878 = vsyncpa [#allocation5], 1
    %s1879 = scalar_lea.sflag [#allocation5], 1
    %1880 = vsyncpa %s1879, 1
    %1881 = vsyncpa [#allocation8], 1

</llo_original>
